<compile_context>
chip_gen: v5e
topology: v5e:2x2
jax: 0.10.0
libtpu: 0.0.40
codegen_flags: <defaults>
</compile_context>

<pallas_src>
import functools

import jax
import jax.numpy as jnp
from jax.experimental import pallas as pl
from jax.experimental.pallas import tpu as pltpu

HIDDEN = 768


def _round_up(x, m):
    return ((x + m - 1) // m) * m


def _eltwise_bf16_ok():
    """bf16 VPU/EUP paths exist on v6e / v7x; keep f32 elementwise on v5 and older."""
    try:
        kind = jax.devices()[0].device_kind.lower()
    except Exception:
        return False
    return not any(t in kind for t in ("v2", "v3", "v4", "v5"))


def _similarity_kernel(cls_ref, wp_ref, bp_ref, wf_ref, bf_ref, out_ref, *, bf16_eltwise):
    # Cast activations to bf16 in-kernel (single HBM read of the f32 producer),
    # bf16 x bf16 on the MXU, f32 accumulation, f32 bias.
    x = cls_ref[...]
    if x.dtype != jnp.bfloat16:
        x = x.astype(jnp.bfloat16)
    acc = jnp.dot(x, wp_ref[...], preferred_element_type=jnp.float32) + bp_ref[...]

    # BERT pooler tanh + similarity head: sigmoid(pooled @ w_fc + b_fc) with w_fc
    # stored lane-dense as (1, 768): VPU multiply + cross-lane (XLU) reduce, so
    # the MXU is not wasted on an N=1 matmul.
    if bf16_eltwise:
        pooled = jnp.tanh(acc.astype(jnp.bfloat16))          # bf16 EUP path (v6e/v7x)
        prod = pooled * wf_ref[...].astype(jnp.bfloat16)
    else:
        pooled = jnp.tanh(acc)                               # f32 path (v5e)
        prod = pooled * wf_ref[...]
    logit = jnp.sum(prod.astype(jnp.float32), axis=-1, keepdims=True) + bf_ref[0]
    out_ref[...] = jax.nn.sigmoid(logit).astype(out_ref.dtype)


def prepare_params(w_pool, b_pool, w_fc, b_fc):
    """One-time (model-load) parameter prep: bf16 frozen pooler weight, lane-dense fc row."""
    return {
        "w_pool": jnp.asarray(w_pool, jnp.bfloat16),                       # (768, 768) bf16
        "b_pool": jnp.asarray(b_pool, jnp.float32).reshape(1, HIDDEN),     # (1, 768) f32
        "w_fc": jnp.asarray(w_fc, jnp.float32).reshape(1, HIDDEN),         # (1, 768) f32
        "b_fc": jnp.asarray(b_fc, jnp.float32).reshape(1),                 # (1,) f32 -> SMEM
    }


def sentence_similarity(cls_hidden, params, *, tb=512):
    """cls_hidden: (B, 768) f32 or bf16 -> (B, 1) f32 similarity scores."""
    B = cls_hidden.shape[0]
    assert cls_hidden.shape[1] == HIDDEN

    # Batch tile: multiple of 16 (bf16 packed sublanes). Keep >= 2 grid steps once
    # B > 16 so the "parallel" batch axis shards across v7x's two TensorCores, and
    # bound padding waste to < TB. (On v5e a multiple-of-128 TB is marginally
    # better for the 128x128 MXUs; multiple-of-16 is correct everywhere.)
    tb = max(16, (tb // 16) * 16)
    b16 = _round_up(B, 16)
    TB = min(tb, b16)
    if b16 >= 32:
        TB = min(TB, _round_up(pl.cdiv(b16, 2), 16))
    padded_B = _round_up(B, TB)
    if padded_B != B:
        cls_hidden = jnp.pad(cls_hidden, ((0, padded_B - B), (0, 0)))

    kernel = functools.partial(_similarity_kernel, bf16_eltwise=_eltwise_bf16_ok())

    out = pl.pallas_call(
        kernel,
        out_shape=jax.ShapeDtypeStruct((padded_B, 1), jnp.float32),
        grid=(padded_B // TB,),
        in_specs=[
            pl.BlockSpec((TB, HIDDEN), lambda i: (i, 0)),       # activations, tiled over B
            pl.BlockSpec((HIDDEN, HIDDEN), lambda i: (0, 0)),   # pooler weight, VMEM-resident
            pl.BlockSpec((1, HIDDEN), lambda i: (0, 0)),        # pooler bias, resident
            pl.BlockSpec((1, HIDDEN), lambda i: (0, 0)),        # fc weight row, resident
            pl.BlockSpec(memory_space=pltpu.MemorySpace.SMEM),  # fc bias scalar
        ],
        out_specs=pl.BlockSpec((TB, 1), lambda i: (i, 0)),
        compiler_params=pltpu.CompilerParams(
            dimension_semantics=("parallel",),
        ),
    )(cls_hidden, params["w_pool"], params["b_pool"], params["w_fc"], params["b_fc"])
    return out[:B]


def reference(cls_hidden, w_pool, b_pool, w_fc, b_fc):
    pooled = jnp.tanh(cls_hidden @ w_pool + b_pool.reshape(1, HIDDEN))
    return jax.nn.sigmoid(pooled @ w_fc.reshape(HIDDEN, 1) + b_fc.reshape(1, 1))


if __name__ == "__main__":
    key = jax.random.PRNGKey(0)
    k_cls, k_wp, k_bp, k_wf, k_bf = jax.random.split(key, 5)

    B = 8  # small batch
    # Synthetic CLS hidden state standing in for the frozen BERT encoder output.
    cls_hidden = jax.random.normal(k_cls, (B, HIDDEN), dtype=jnp.float32)

    # Deterministic parameter init (shapes match bert pooler + nn.Linear(768, 1)).
    w_pool = jax.random.normal(k_wp, (HIDDEN, HIDDEN), dtype=jnp.float32) * 0.02
    b_pool = jax.random.normal(k_bp, (1, HIDDEN), dtype=jnp.float32) * 0.02
    w_fc = jax.random.normal(k_wf, (HIDDEN, 1), dtype=jnp.float32) * 0.02
    b_fc = jax.random.normal(k_bf, (1, 1), dtype=jnp.float32) * 0.02

    # One-time parameter prep (bf16 weight cast happens here, not per call).
    params = prepare_params(w_pool, b_pool, w_fc, b_fc)

    out = jax.block_until_ready(sentence_similarity(cls_hidden, params))
    ref = reference(cls_hidden, w_pool, b_pool, w_fc, b_fc)

    assert out.shape == (B, 1), out.shape
    # bf16 weight/activation path: loosen tolerance vs the f32 reference.
    assert jnp.allclose(out, ref, atol=2e-2, rtol=2e-2), (out, ref)
    print("KERNEL_OK")
</pallas_src>

<mosaic_0001>
module attributes {stable_mosaic.version = 11 : i64} {
  func.func @_similarity_kernel(%arg0: i32, %arg1: memref<16x768xf32, #tpu.memory_space<vmem>>, %arg2: memref<768x768xbf16, #tpu.memory_space<vmem>>, %arg3: memref<1x768xf32, #tpu.memory_space<vmem>>, %arg4: memref<1x768xf32, #tpu.memory_space<vmem>>, %arg5: memref<1xf32, #tpu.memory_space<smem>>, %arg6: memref<16x1xf32, #tpu.memory_space<vmem>>) attributes {dimension_semantics = [#tpu.dimension_semantics<parallel>], iteration_bounds = array<i64: 1>, scalar_prefetch = 0 : i64, scratch_operands = 0 : i64, tpu.core_type = #tpu.core_type<tc>, window_params = [{transform_indices = @transform_0, window_bounds = array<i64: 16, 768>}, {pipeline_mode = #tpu.pipeline_mode<synchronous>, transform_indices = @transform_1, window_bounds = array<i64: 768, 768>}, {pipeline_mode = #tpu.pipeline_mode<synchronous>, transform_indices = @transform_2, window_bounds = array<i64: 1, 768>}, {pipeline_mode = #tpu.pipeline_mode<synchronous>, transform_indices = @transform_3, window_bounds = array<i64: 1, 768>}, {transform_indices = @transform_4, window_bounds = array<i64: 1>}, {transform_indices = @transform_5, window_bounds = array<i64: 16, 1>}]} {
    %c0 = arith.constant 0 : index
    %c0_0 = arith.constant 0 : index
    %0 = vector.load %arg1[%c0, %c0_0] : memref<16x768xf32, #tpu.memory_space<vmem>>, vector<16x768xf32>
    %1 = arith.truncf %0 : vector<16x768xf32> to vector<16x768xbf16>
    %c0_1 = arith.constant 0 : index
    %c0_2 = arith.constant 0 : index
    %2 = vector.load %arg2[%c0_1, %c0_2] : memref<768x768xbf16, #tpu.memory_space<vmem>>, vector<768x768xbf16>
    %cst = arith.constant dense<0.000000e+00> : vector<16x768xf32>
    %3 = tpu.matmul %1, %2, %cst {dimension_numbers = #tpu.dot_dimension_numbers<[1], [0], [0], [1], [0, 0, 1, 1], [], []>} : vector<16x768xbf16>, vector<768x768xbf16>, vector<16x768xf32> -> vector<16x768xf32>
    %c0_3 = arith.constant 0 : index
    %c0_4 = arith.constant 0 : index
    %4 = vector.load %arg3[%c0_3, %c0_4] : memref<1x768xf32, #tpu.memory_space<vmem>>, vector<1x768xf32>
    %5 = vector.broadcast %4 : vector<1x768xf32> to vector<16x768xf32>
    %6 = arith.addf %3, %5 : vector<16x768xf32>
    %7 = arith.truncf %6 : vector<16x768xf32> to vector<16x768xbf16>
    %8 = math.tanh %7 : vector<16x768xbf16>
    %c0_5 = arith.constant 0 : index
    %c0_6 = arith.constant 0 : index
    %9 = vector.load %arg4[%c0_5, %c0_6] : memref<1x768xf32, #tpu.memory_space<vmem>>, vector<1x768xf32>
    %10 = arith.truncf %9 : vector<1x768xf32> to vector<1x768xbf16>
    %11 = vector.broadcast %10 : vector<1x768xbf16> to vector<16x768xbf16>
    %12 = arith.mulf %8, %11 : vector<16x768xbf16>
    %13 = arith.extf %12 : vector<16x768xbf16> to vector<16x768xf32>
    %cst_7 = arith.constant dense<0.000000e+00> : vector<16xf32>
    %14 = vector.multi_reduction <add>, %13, %cst_7 [1] : vector<16x768xf32> to vector<16xf32>
    %15 = vector.shape_cast %14 : vector<16xf32> to vector<16x1xf32>
    %c0_8 = arith.constant 0 : index
    %16 = memref.load %arg5[%c0_8] : memref<1xf32, #tpu.memory_space<smem>>
    %17 = vector.broadcast %16 : f32 to vector<16x1xf32>
    %18 = arith.addf %15, %17 : vector<16x1xf32>
    %19 = arith.negf %18 : vector<16x1xf32>
    %20 = math.exp %19 : vector<16x1xf32>
    %cst_9 = arith.constant 1.000000e+00 : f32
    %21 = vector.broadcast %cst_9 : f32 to vector<16x1xf32>
    %22 = arith.addf %21, %20 : vector<16x1xf32>
    %23 = arith.divf %21, %22 : vector<16x1xf32>
    %c0_10 = arith.constant 0 : index
    %c0_11 = arith.constant 0 : index
    %24 = vector.load %arg6[%c0_10, %c0_11] : memref<16x1xf32, #tpu.memory_space<vmem>>, vector<16x1xf32>
    tpu.vector_store %arg6[%c0_10, %c0_11], %23 {strides = array<i32>} : memref<16x1xf32, #tpu.memory_space<vmem>>, vector<16x1xf32>,
    return
  }
  func.func @transform_0(%arg0: i32) -> (i32, i32) {
    %c0_i32 = arith.constant 0 : i32
    %c0_i32_0 = arith.constant 0 : i32
    return %arg0, %c0_i32 : i32, i32
  }
  func.func @transform_1(%arg0: i32) -> (i32, i32) {
    %c0_i32 = arith.constant 0 : i32
    %c0_i32_0 = arith.constant 0 : i32
    %c0_i32_1 = arith.constant 0 : i32
    return %c0_i32, %c0_i32_0 : i32, i32
  }
  func.func @transform_2(%arg0: i32) -> (i32, i32) {
    %c0_i32 = arith.constant 0 : i32
    %c0_i32_0 = arith.constant 0 : i32
    %c0_i32_1 = arith.constant 0 : i32
    return %c0_i32, %c0_i32_0 : i32, i32
  }
  func.func @transform_3(%arg0: i32) -> (i32, i32) {
    %c0_i32 = arith.constant 0 : i32
    %c0_i32_0 = arith.constant 0 : i32
    %c0_i32_1 = arith.constant 0 : i32
    return %c0_i32, %c0_i32_0 : i32, i32
  }
  func.func @transform_4(%arg0: i32) -> i32 {
    %c0_i32 = arith.constant 0 : i32
    %c0_i32_0 = arith.constant 0 : i32
    return %c0_i32 : i32
  }
  func.func @transform_5(%arg0: i32) -> (i32, i32) {
    %c0_i32 = arith.constant 0 : i32
    %c0_i32_0 = arith.constant 0 : i32
    return %arg0, %c0_i32 : i32, i32
  }
}

</mosaic_0001>

<llo_original>
// kernel: tpu_custom_call.1
$region0: #{tpu_custom_call.1}
  #allocation0 [shape = 'u32[]', space=smem, size = 0x4, offset = 0x4, fixed_abs, tag = 'smem constant byte address 0x4 - core index']
  #allocation1 [shape = 'u32[72,128]{1,0:T(1,128)}', space=vmem, size = 0x9000, scoped, tag = 'internal scratch']
  #allocation2 [shape = 'f32[1]{0:T(128)S(6)}', space=smem, size = 0x200, scoped, tag = 'scoped memory for tpu_custom_call.1']
  %s0 = inlined_call_operand.hbm [shape: f32[16,768], index: 0, kind: input, shape index: {}]
  %s1 = inlined_call_operand.hbm [shape: bf16[768,768], index: 1, kind: input, shape index: {}]
  %s2 = inlined_call_operand.hbm [shape: f32[1,768], index: 2, kind: input, shape index: {}]
  %s3 = inlined_call_operand.hbm [shape: f32[1,768], index: 3, kind: input, shape index: {}]
  %s4 = inlined_call_operand.<no memory space> [shape: f32[1], index: 4, kind: input, shape index: {}]
  %s5 = inlined_call_operand.vmem [shape: f32[16,1], index: 5, kind: output, shape index: {}]
  %s6 = sld [smem:[#allocation0]]
  $region46: #{tpu_custom_call.1} parent=0
    _
  %s8 = ssub.s32 1, %s6
  %s9 = scalar_select 0, %s8, %s6
  %10 = sst [smem:[#allocation2]] %s4
  $region1: #{tpu_custom_call.1} parent=0
    #allocation3 [shape = 'u8[49152]{0}', space=vmem, size = 0xc000, scoped, tag = 'input window, operand 0, single buffered']
    #allocation4 [shape = 's32[1]{0}', space=sflag, size = 0x4, scoped, tag = 'scoped memory for tpu_custom_call.1']
    #allocation5 [shape = 'u8[1179648]{0}', space=vmem, size = 0x120000, scoped, tag = 'input window, operand 1, single buffered']
    #allocation6 [shape = 's32[1]{0}', space=sflag, size = 0x4, scoped, tag = 'scoped memory for tpu_custom_call.1']
    #allocation7 [shape = 'u8[3072]{0}', space=vmem, size = 0xc00, scoped, tag = 'input window, operand 2, single buffered']
    #allocation8 [shape = 'u8[3072]{0}', space=vmem, size = 0xc00, scoped, tag = 'input window, operand 3, single buffered']
    #allocation9 [shape = 's32[1]{0}', space=sflag, size = 0x4, scoped, tag = 'scoped memory for tpu_custom_call.1']
    %11 = vsyncpa [#allocation4], 0
    %12 = vsyncpa [#allocation6], 0
    %13 = vsyncpa [#allocation9], 0
    // Predicated region
    $region2: #{tpu_custom_call.1} parent=1 // pred_check
      _
    $region3: #{tpu_custom_call.1} parent=1 // pred_check_branch
      %15 = sbr.rel (0) target = $region5
    $region4: #{tpu_custom_call.1} parent=1 // pred_region
      %17 = vsyncadd [#allocation4], 0
      %s18 = sshll.u32 %s0, 4
      %s19 = int_to_ptr.hbm [resolvable:$true] %s18
      %s20 = sshll.u32 [#allocation3], 4
      %s21 = int_to_ptr.vmem [resolvable:$true] %s20
      %26 = dma.hbm_to_vmem [thread:$0]  %s19, 1536, %s21, [#allocation4], 768, 768, 48
    $region5: #{tpu_custom_call.1} parent=1 // pred_fallthru
      _
    // Predicated region
    $region6: #{tpu_custom_call.1} parent=1 // pred_check
      _
    $region7: #{tpu_custom_call.1} parent=1 // pred_check_branch
      %28 = sbr.rel (0) target = $region9
    $region8: #{tpu_custom_call.1} parent=1 // pred_region
      %30 = vsyncadd [#allocation6], 0
      %s31 = sshll.u32 %s1, 4
      %s32 = int_to_ptr.hbm [resolvable:$true] %s31
      %s33 = sshll.u32 [#allocation5], 4
      %s34 = int_to_ptr.vmem [resolvable:$true] %s33
      %39 = dma.hbm_to_vmem [thread:$0]  %s32, 36864, %s34, [#allocation6], 384, 384, 24
    $region9: #{tpu_custom_call.1} parent=1 // pred_fallthru
      _
    // Predicated region
    $region10: #{tpu_custom_call.1} parent=1 // pred_check
      _
    $region11: #{tpu_custom_call.1} parent=1 // pred_check_branch
      %41 = sbr.rel (0) target = $region13
    $region12: #{tpu_custom_call.1} parent=1 // pred_region
      %43 = vsyncadd [#allocation6], 0
      %s45 = sshll.u32 %s2, 4
      %s46 = int_to_ptr.hbm [resolvable:$true] %s45
      %s47 = sshll.u32 [#allocation7], 4
      %s48 = int_to_ptr.vmem [resolvable:$true] %s47
      %50 = dma.hbm_to_vmem [thread:$0]  %s46, 96, %s48, [#allocation6]
    $region13: #{tpu_custom_call.1} parent=1 // pred_fallthru
      _
    // Predicated region
    $region14: #{tpu_custom_call.1} parent=1 // pred_check
      _
    $region15: #{tpu_custom_call.1} parent=1 // pred_check_branch
      %52 = sbr.rel (0) target = $region17
    $region16: #{tpu_custom_call.1} parent=1 // pred_region
      %54 = vsyncadd [#allocation9], 0
      %s56 = sshll.u32 %s3, 4
      %s57 = int_to_ptr.hbm [resolvable:$true] %s56
      %s58 = sshll.u32 [#allocation8], 4
      %s59 = int_to_ptr.vmem [resolvable:$true] %s58
      %61 = dma.hbm_to_vmem [thread:$0]  %s57, 96, %s59, [#allocation9]
    $region17: #{tpu_custom_call.1} parent=1 // pred_fallthru
      _
    // Predicated region
    $region18: #{tpu_custom_call.1} parent=1 // pred_check
      _
    $region19: #{tpu_custom_call.1} parent=1 // pred_check_branch
      %63 = sbr.rel (0) target = $region21
    $region20: #{tpu_custom_call.1} parent=1 // pred_region
      _
    $region21: #{tpu_custom_call.1} parent=1 // pred_fallthru
      _
    // Predicated region
    $region22: #{tpu_custom_call.1} parent=1 // pred_check
      _
    $region23: #{tpu_custom_call.1} parent=1 // pred_check_branch
      %65 = sbr.rel (0) target = $region25
    $region24: #{tpu_custom_call.1} parent=1 // pred_region
      %67 = dma.done [#allocation4], 1536
    $region25: #{tpu_custom_call.1} parent=1 // pred_fallthru
      _
    // Predicated region
    $region26: #{tpu_custom_call.1} parent=1 // pred_check
      _
    $region27: #{tpu_custom_call.1} parent=1 // pred_check_branch
      %69 = sbr.rel (0) target = $region29
    $region28: #{tpu_custom_call.1} parent=1 // pred_region
      %71 = dma.done [#allocation6], 36864
    $region29: #{tpu_custom_call.1} parent=1 // pred_fallthru
      _
    // Predicated region
    $region30: #{tpu_custom_call.1} parent=1 // pred_check
      _
    $region31: #{tpu_custom_call.1} parent=1 // pred_check_branch
      %73 = sbr.rel (0) target = $region33
    $region32: #{tpu_custom_call.1} parent=1 // pred_region
      %75 = dma.done [#allocation6], 96
    $region33: #{tpu_custom_call.1} parent=1 // pred_fallthru
      _
    // Predicated region
    $region34: #{tpu_custom_call.1} parent=1 // pred_check
      _
    $region35: #{tpu_custom_call.1} parent=1 // pred_check_branch
      %77 = sbr.rel (0) target = $region37
    $region36: #{tpu_custom_call.1} parent=1 // pred_region
      %79 = dma.done [#allocation9], 96
    $region37: #{tpu_custom_call.1} parent=1 // pred_fallthru
      _
    %v80 = vld [vmem:[#allocation3] sm:$0xff]
    %v81 = vld [vmem:[#allocation3 + $0x8] sm:$0xff]
    %v82 = vld [vmem:[#allocation3 + $0x10] sm:$0xff]
    %v83 = vld [vmem:[#allocation3 + $0x18] sm:$0xff]
    %v84 = vld [vmem:[#allocation3 + $0x20] sm:$0xff]
    %v85 = vld [vmem:[#allocation3 + $0x28] sm:$0xff]
    %v86 = vld [vmem:[#allocation3 + $0x30] sm:$0xff]
    %v87 = vld [vmem:[#allocation3 + $0x38] sm:$0xff]
    %v88 = vld [vmem:[#allocation3 + $0x40] sm:$0xff]
    %v89 = vld [vmem:[#allocation3 + $0x48] sm:$0xff]
    %v90 = vld [vmem:[#allocation3 + $0x50] sm:$0xff]
    %v91 = vld [vmem:[#allocation3 + $0x58] sm:$0xff]
    %v92 = vpack.c.bf16 %v86, %v80
    %v93 = vpack.c.bf16 %v87, %v81
    %v94 = vpack.c.bf16 %v88, %v82
    %v95 = vpack.c.bf16 %v89, %v83
    %v96 = vpack.c.bf16 %v90, %v84
    %v97 = vpack.c.bf16 %v91, %v85
    %v98 = vld [vmem:[#allocation5] sm:$0xff]
    %v99 = vld [vmem:[#allocation5 + $0x8] sm:$0xff]
    %v100 = vld [vmem:[#allocation5 + $0x10] sm:$0xff]
    %v101 = vld [vmem:[#allocation5 + $0x18] sm:$0xff]
    %v102 = vld [vmem:[#allocation5 + $0x20] sm:$0xff]
    %v103 = vld [vmem:[#allocation5 + $0x28] sm:$0xff]
    %v104 = vld [vmem:[#allocation5 + $0x30] sm:$0xff]
    %v105 = vld [vmem:[#allocation5 + $0x38] sm:$0xff]
    %v106 = vld [vmem:[#allocation5 + $0x40] sm:$0xff]
    %v107 = vld [vmem:[#allocation5 + $0x48] sm:$0xff]
    %v108 = vld [vmem:[#allocation5 + $0x50] sm:$0xff]
    %v109 = vld [vmem:[#allocation5 + $0x58] sm:$0xff]
    %v110 = vld [vmem:[#allocation5 + $0x60] sm:$0xff]
    %v111 = vld [vmem:[#allocation5 + $0x68] sm:$0xff]
    %v112 = vld [vmem:[#allocation5 + $0x70] sm:$0xff]
    %v113 = vld [vmem:[#allocation5 + $0x78] sm:$0xff]
    %v114 = vld [vmem:[#allocation5 + $0x80] sm:$0xff]
    %v115 = vld [vmem:[#allocation5 + $0x88] sm:$0xff]
    %v116 = vld [vmem:[#allocation5 + $0x90] sm:$0xff]
    %v117 = vld [vmem:[#allocation5 + $0x98] sm:$0xff]
    %v118 = vld [vmem:[#allocation5 + $0xa0] sm:$0xff]
    %v119 = vld [vmem:[#allocation5 + $0xa8] sm:$0xff]
    %v120 = vld [vmem:[#allocation5 + $0xb0] sm:$0xff]
    %v121 = vld [vmem:[#allocation5 + $0xb8] sm:$0xff]
    %v122 = vld [vmem:[#allocation5 + $0xc0] sm:$0xff]
    %v123 = vld [vmem:[#allocation5 + $0xc8] sm:$0xff]
    %v124 = vld [vmem:[#allocation5 + $0xd0] sm:$0xff]
    %v125 = vld [vmem:[#allocation5 + $0xd8] sm:$0xff]
    %v126 = vld [vmem:[#allocation5 + $0xe0] sm:$0xff]
    %v127 = vld [vmem:[#allocation5 + $0xe8] sm:$0xff]
    %v128 = vld [vmem:[#allocation5 + $0xf0] sm:$0xff]
    %v129 = vld [vmem:[#allocation5 + $0xf8] sm:$0xff]
    %v130 = vld [vmem:[#allocation5 + $0x100] sm:$0xff]
    %v131 = vld [vmem:[#allocation5 + $0x108] sm:$0xff]
    %v132 = vld [vmem:[#allocation5 + $0x110] sm:$0xff]
    %v133 = vld [vmem:[#allocation5 + $0x118] sm:$0xff]
    %v134 = vld [vmem:[#allocation5 + $0x120] sm:$0xff]
    %v135 = vld [vmem:[#allocation5 + $0x128] sm:$0xff]
    %v136 = vld [vmem:[#allocation5 + $0x130] sm:$0xff]
    %v137 = vld [vmem:[#allocation5 + $0x138] sm:$0xff]
    %v138 = vld [vmem:[#allocation5 + $0x140] sm:$0xff]
    %v139 = vld [vmem:[#allocation5 + $0x148] sm:$0xff]
    %v140 = vld [vmem:[#allocation5 + $0x150] sm:$0xff]
    %v141 = vld [vmem:[#allocation5 + $0x158] sm:$0xff]
    %v142 = vld [vmem:[#allocation5 + $0x160] sm:$0xff]
    %v143 = vld [vmem:[#allocation5 + $0x168] sm:$0xff]
    %v144 = vld [vmem:[#allocation5 + $0x170] sm:$0xff]
    %v145 = vld [vmem:[#allocation5 + $0x178] sm:$0xff]
    %v146 = vld [vmem:[#allocation5 + $0x180] sm:$0xff]
    %v147 = vld [vmem:[#allocation5 + $0x188] sm:$0xff]
    %v148 = vld [vmem:[#allocation5 + $0x190] sm:$0xff]
    %v149 = vld [vmem:[#allocation5 + $0x198] sm:$0xff]
    %v150 = vld [vmem:[#allocation5 + $0x1a0] sm:$0xff]
    %v151 = vld [vmem:[#allocation5 + $0x1a8] sm:$0xff]
    %v152 = vld [vmem:[#allocation5 + $0x1b0] sm:$0xff]
    %v153 = vld [vmem:[#allocation5 + $0x1b8] sm:$0xff]
    %v154 = vld [vmem:[#allocation5 + $0x1c0] sm:$0xff]
    %v155 = vld [vmem:[#allocation5 + $0x1c8] sm:$0xff]
    %v156 = vld [vmem:[#allocation5 + $0x1d0] sm:$0xff]
    %v157 = vld [vmem:[#allocation5 + $0x1d8] sm:$0xff]
    %v158 = vld [vmem:[#allocation5 + $0x1e0] sm:$0xff]
    %v159 = vld [vmem:[#allocation5 + $0x1e8] sm:$0xff]
    %v160 = vld [vmem:[#allocation5 + $0x1f0] sm:$0xff]
    %v161 = vld [vmem:[#allocation5 + $0x1f8] sm:$0xff]
    %v162 = vld [vmem:[#allocation5 + $0x200] sm:$0xff]
    %v163 = vld [vmem:[#allocation5 + $0x208] sm:$0xff]
    %v164 = vld [vmem:[#allocation5 + $0x210] sm:$0xff]
    %v165 = vld [vmem:[#allocation5 + $0x218] sm:$0xff]
    %v166 = vld [vmem:[#allocation5 + $0x220] sm:$0xff]
    %v167 = vld [vmem:[#allocation5 + $0x228] sm:$0xff]
    %v168 = vld [vmem:[#allocation5 + $0x230] sm:$0xff]
    %v169 = vld [vmem:[#allocation5 + $0x238] sm:$0xff]
    %v170 = vld [vmem:[#allocation5 + $0x240] sm:$0xff]
    %v171 = vld [vmem:[#allocation5 + $0x248] sm:$0xff]
    %v172 = vld [vmem:[#allocation5 + $0x250] sm:$0xff]
    %v173 = vld [vmem:[#allocation5 + $0x258] sm:$0xff]
    %v174 = vld [vmem:[#allocation5 + $0x260] sm:$0xff]
    %v175 = vld [vmem:[#allocation5 + $0x268] sm:$0xff]
    %v176 = vld [vmem:[#allocation5 + $0x270] sm:$0xff]
    %v177 = vld [vmem:[#allocation5 + $0x278] sm:$0xff]
    %v178 = vld [vmem:[#allocation5 + $0x280] sm:$0xff]
    %v179 = vld [vmem:[#allocation5 + $0x288] sm:$0xff]
    %v180 = vld [vmem:[#allocation5 + $0x290] sm:$0xff]
    %v181 = vld [vmem:[#allocation5 + $0x298] sm:$0xff]
    %v182 = vld [vmem:[#allocation5 + $0x2a0] sm:$0xff]
    %v183 = vld [vmem:[#allocation5 + $0x2a8] sm:$0xff]
    %v184 = vld [vmem:[#allocation5 + $0x2b0] sm:$0xff]
    %v185 = vld [vmem:[#allocation5 + $0x2b8] sm:$0xff]
    %v186 = vld [vmem:[#allocation5 + $0x2c0] sm:$0xff]
    %v187 = vld [vmem:[#allocation5 + $0x2c8] sm:$0xff]
    %v188 = vld [vmem:[#allocation5 + $0x2d0] sm:$0xff]
    %v189 = vld [vmem:[#allocation5 + $0x2d8] sm:$0xff]
    %v190 = vld [vmem:[#allocation5 + $0x2e0] sm:$0xff]
    %v191 = vld [vmem:[#allocation5 + $0x2e8] sm:$0xff]
    %v192 = vld [vmem:[#allocation5 + $0x2f0] sm:$0xff]
    %v193 = vld [vmem:[#allocation5 + $0x2f8] sm:$0xff]
    %v194 = vld [vmem:[#allocation5 + $0x300] sm:$0xff]
    %v195 = vld [vmem:[#allocation5 + $0x308] sm:$0xff]
    %v196 = vld [vmem:[#allocation5 + $0x310] sm:$0xff]
    %v197 = vld [vmem:[#allocation5 + $0x318] sm:$0xff]
    %v198 = vld [vmem:[#allocation5 + $0x320] sm:$0xff]
    %v199 = vld [vmem:[#allocation5 + $0x328] sm:$0xff]
    %v200 = vld [vmem:[#allocation5 + $0x330] sm:$0xff]
    %v201 = vld [vmem:[#allocation5 + $0x338] sm:$0xff]
    %v202 = vld [vmem:[#allocation5 + $0x340] sm:$0xff]
    %v203 = vld [vmem:[#allocation5 + $0x348] sm:$0xff]
    %v204 = vld [vmem:[#allocation5 + $0x350] sm:$0xff]
    %v205 = vld [vmem:[#allocation5 + $0x358] sm:$0xff]
    %v206 = vld [vmem:[#allocation5 + $0x360] sm:$0xff]
    %v207 = vld [vmem:[#allocation5 + $0x368] sm:$0xff]
    %v208 = vld [vmem:[#allocation5 + $0x370] sm:$0xff]
    %v209 = vld [vmem:[#allocation5 + $0x378] sm:$0xff]
    %v210 = vld [vmem:[#allocation5 + $0x380] sm:$0xff]
    %v211 = vld [vmem:[#allocation5 + $0x388] sm:$0xff]
    %v212 = vld [vmem:[#allocation5 + $0x390] sm:$0xff]
    %v213 = vld [vmem:[#allocation5 + $0x398] sm:$0xff]
    %v214 = vld [vmem:[#allocation5 + $0x3a0] sm:$0xff]
    %v215 = vld [vmem:[#allocation5 + $0x3a8] sm:$0xff]
    %v216 = vld [vmem:[#allocation5 + $0x3b0] sm:$0xff]
    %v217 = vld [vmem:[#allocation5 + $0x3b8] sm:$0xff]
    %v218 = vld [vmem:[#allocation5 + $0x3c0] sm:$0xff]
    %v219 = vld [vmem:[#allocation5 + $0x3c8] sm:$0xff]
    %v220 = vld [vmem:[#allocation5 + $0x3d0] sm:$0xff]
    %v221 = vld [vmem:[#allocation5 + $0x3d8] sm:$0xff]
    %v222 = vld [vmem:[#allocation5 + $0x3e0] sm:$0xff]
    %v223 = vld [vmem:[#allocation5 + $0x3e8] sm:$0xff]
    %v224 = vld [vmem:[#allocation5 + $0x3f0] sm:$0xff]
    %v225 = vld [vmem:[#allocation5 + $0x3f8] sm:$0xff]
    %v226 = vld [vmem:[#allocation5 + $0x400] sm:$0xff]
    %v227 = vld [vmem:[#allocation5 + $0x408] sm:$0xff]
    %v228 = vld [vmem:[#allocation5 + $0x410] sm:$0xff]
    %v229 = vld [vmem:[#allocation5 + $0x418] sm:$0xff]
    %v230 = vld [vmem:[#allocation5 + $0x420] sm:$0xff]
    %v231 = vld [vmem:[#allocation5 + $0x428] sm:$0xff]
    %v232 = vld [vmem:[#allocation5 + $0x430] sm:$0xff]
    %v233 = vld [vmem:[#allocation5 + $0x438] sm:$0xff]
    %v234 = vld [vmem:[#allocation5 + $0x440] sm:$0xff]
    %v235 = vld [vmem:[#allocation5 + $0x448] sm:$0xff]
    %v236 = vld [vmem:[#allocation5 + $0x450] sm:$0xff]
    %v237 = vld [vmem:[#allocation5 + $0x458] sm:$0xff]
    %v238 = vld [vmem:[#allocation5 + $0x460] sm:$0xff]
    %v239 = vld [vmem:[#allocation5 + $0x468] sm:$0xff]
    %v240 = vld [vmem:[#allocation5 + $0x470] sm:$0xff]
    %v241 = vld [vmem:[#allocation5 + $0x478] sm:$0xff]
    %v242 = vld [vmem:[#allocation5 + $0x480] sm:$0xff]
    %v243 = vld [vmem:[#allocation5 + $0x488] sm:$0xff]
    %v244 = vld [vmem:[#allocation5 + $0x490] sm:$0xff]
    %v245 = vld [vmem:[#allocation5 + $0x498] sm:$0xff]
    %v246 = vld [vmem:[#allocation5 + $0x4a0] sm:$0xff]
    %v247 = vld [vmem:[#allocation5 + $0x4a8] sm:$0xff]
    %v248 = vld [vmem:[#allocation5 + $0x4b0] sm:$0xff]
    %v249 = vld [vmem:[#allocation5 + $0x4b8] sm:$0xff]
    %v250 = vld [vmem:[#allocation5 + $0x4c0] sm:$0xff]
    %v251 = vld [vmem:[#allocation5 + $0x4c8] sm:$0xff]
    %v252 = vld [vmem:[#allocation5 + $0x4d0] sm:$0xff]
    %v253 = vld [vmem:[#allocation5 + $0x4d8] sm:$0xff]
    %v254 = vld [vmem:[#allocation5 + $0x4e0] sm:$0xff]
    %v255 = vld [vmem:[#allocation5 + $0x4e8] sm:$0xff]
    %v256 = vld [vmem:[#allocation5 + $0x4f0] sm:$0xff]
    %v257 = vld [vmem:[#allocation5 + $0x4f8] sm:$0xff]
    %v258 = vld [vmem:[#allocation5 + $0x500] sm:$0xff]
    %v259 = vld [vmem:[#allocation5 + $0x508] sm:$0xff]
    %v260 = vld [vmem:[#allocation5 + $0x510] sm:$0xff]
    %v261 = vld [vmem:[#allocation5 + $0x518] sm:$0xff]
    %v262 = vld [vmem:[#allocation5 + $0x520] sm:$0xff]
    %v263 = vld [vmem:[#allocation5 + $0x528] sm:$0xff]
    %v264 = vld [vmem:[#allocation5 + $0x530] sm:$0xff]
    %v265 = vld [vmem:[#allocation5 + $0x538] sm:$0xff]
    %v266 = vld [vmem:[#allocation5 + $0x540] sm:$0xff]
    %v267 = vld [vmem:[#allocation5 + $0x548] sm:$0xff]
    %v268 = vld [vmem:[#allocation5 + $0x550] sm:$0xff]
    %v269 = vld [vmem:[#allocation5 + $0x558] sm:$0xff]
    %v270 = vld [vmem:[#allocation5 + $0x560] sm:$0xff]
    %v271 = vld [vmem:[#allocation5 + $0x568] sm:$0xff]
    %v272 = vld [vmem:[#allocation5 + $0x570] sm:$0xff]
    %v273 = vld [vmem:[#allocation5 + $0x578] sm:$0xff]
    %v274 = vld [vmem:[#allocation5 + $0x580] sm:$0xff]
    %v275 = vld [vmem:[#allocation5 + $0x588] sm:$0xff]
    %v276 = vld [vmem:[#allocation5 + $0x590] sm:$0xff]
    %v277 = vld [vmem:[#allocation5 + $0x598] sm:$0xff]
    %v278 = vld [vmem:[#allocation5 + $0x5a0] sm:$0xff]
    %v279 = vld [vmem:[#allocation5 + $0x5a8] sm:$0xff]
    %v280 = vld [vmem:[#allocation5 + $0x5b0] sm:$0xff]
    %v281 = vld [vmem:[#allocation5 + $0x5b8] sm:$0xff]
    %v282 = vld [vmem:[#allocation5 + $0x5c0] sm:$0xff]
    %v283 = vld [vmem:[#allocation5 + $0x5c8] sm:$0xff]
    %v284 = vld [vmem:[#allocation5 + $0x5d0] sm:$0xff]
    %v285 = vld [vmem:[#allocation5 + $0x5d8] sm:$0xff]
    %v286 = vld [vmem:[#allocation5 + $0x5e0] sm:$0xff]
    %v287 = vld [vmem:[#allocation5 + $0x5e8] sm:$0xff]
    %v288 = vld [vmem:[#allocation5 + $0x5f0] sm:$0xff]
    %v289 = vld [vmem:[#allocation5 + $0x5f8] sm:$0xff]
    %v290 = vld [vmem:[#allocation5 + $0x600] sm:$0xff]
    %v291 = vld [vmem:[#allocation5 + $0x608] sm:$0xff]
    %v292 = vld [vmem:[#allocation5 + $0x610] sm:$0xff]
    %v293 = vld [vmem:[#allocation5 + $0x618] sm:$0xff]
    %v294 = vld [vmem:[#allocation5 + $0x620] sm:$0xff]
    %v295 = vld [vmem:[#allocation5 + $0x628] sm:$0xff]
    %v296 = vld [vmem:[#allocation5 + $0x630] sm:$0xff]
    %v297 = vld [vmem:[#allocation5 + $0x638] sm:$0xff]
    %v298 = vld [vmem:[#allocation5 + $0x640] sm:$0xff]
    %v299 = vld [vmem:[#allocation5 + $0x648] sm:$0xff]
    %v300 = vld [vmem:[#allocation5 + $0x650] sm:$0xff]
    %v301 = vld [vmem:[#allocation5 + $0x658] sm:$0xff]
    %v302 = vld [vmem:[#allocation5 + $0x660] sm:$0xff]
    %v303 = vld [vmem:[#allocation5 + $0x668] sm:$0xff]
    %v304 = vld [vmem:[#allocation5 + $0x670] sm:$0xff]
    %v305 = vld [vmem:[#allocation5 + $0x678] sm:$0xff]
    %v306 = vld [vmem:[#allocation5 + $0x680] sm:$0xff]
    %v307 = vld [vmem:[#allocation5 + $0x688] sm:$0xff]
    %v308 = vld [vmem:[#allocation5 + $0x690] sm:$0xff]
    %v309 = vld [vmem:[#allocation5 + $0x698] sm:$0xff]
    %v310 = vld [vmem:[#allocation5 + $0x6a0] sm:$0xff]
    %v311 = vld [vmem:[#allocation5 + $0x6a8] sm:$0xff]
    %v312 = vld [vmem:[#allocation5 + $0x6b0] sm:$0xff]
    %v313 = vld [vmem:[#allocation5 + $0x6b8] sm:$0xff]
    %v314 = vld [vmem:[#allocation5 + $0x6c0] sm:$0xff]
    %v315 = vld [vmem:[#allocation5 + $0x6c8] sm:$0xff]
    %v316 = vld [vmem:[#allocation5 + $0x6d0] sm:$0xff]
    %v317 = vld [vmem:[#allocation5 + $0x6d8] sm:$0xff]
    %v318 = vld [vmem:[#allocation5 + $0x6e0] sm:$0xff]
    %v319 = vld [vmem:[#allocation5 + $0x6e8] sm:$0xff]
    %v320 = vld [vmem:[#allocation5 + $0x6f0] sm:$0xff]
    %v321 = vld [vmem:[#allocation5 + $0x6f8] sm:$0xff]
    %v322 = vld [vmem:[#allocation5 + $0x700] sm:$0xff]
    %v323 = vld [vmem:[#allocation5 + $0x708] sm:$0xff]
    %v324 = vld [vmem:[#allocation5 + $0x710] sm:$0xff]
    %v325 = vld [vmem:[#allocation5 + $0x718] sm:$0xff]
    %v326 = vld [vmem:[#allocation5 + $0x720] sm:$0xff]
    %v327 = vld [vmem:[#allocation5 + $0x728] sm:$0xff]
    %v328 = vld [vmem:[#allocation5 + $0x730] sm:$0xff]
    %v329 = vld [vmem:[#allocation5 + $0x738] sm:$0xff]
    %v330 = vld [vmem:[#allocation5 + $0x740] sm:$0xff]
    %v331 = vld [vmem:[#allocation5 + $0x748] sm:$0xff]
    %v332 = vld [vmem:[#allocation5 + $0x750] sm:$0xff]
    %v333 = vld [vmem:[#allocation5 + $0x758] sm:$0xff]
    %v334 = vld [vmem:[#allocation5 + $0x760] sm:$0xff]
    %v335 = vld [vmem:[#allocation5 + $0x768] sm:$0xff]
    %v336 = vld [vmem:[#allocation5 + $0x770] sm:$0xff]
    %v337 = vld [vmem:[#allocation5 + $0x778] sm:$0xff]
    %v338 = vld [vmem:[#allocation5 + $0x780] sm:$0xff]
    %v339 = vld [vmem:[#allocation5 + $0x788] sm:$0xff]
    %v340 = vld [vmem:[#allocation5 + $0x790] sm:$0xff]
    %v341 = vld [vmem:[#allocation5 + $0x798] sm:$0xff]
    %v342 = vld [vmem:[#allocation5 + $0x7a0] sm:$0xff]
    %v343 = vld [vmem:[#allocation5 + $0x7a8] sm:$0xff]
    %v344 = vld [vmem:[#allocation5 + $0x7b0] sm:$0xff]
    %v345 = vld [vmem:[#allocation5 + $0x7b8] sm:$0xff]
    %v346 = vld [vmem:[#allocation5 + $0x7c0] sm:$0xff]
    %v347 = vld [vmem:[#allocation5 + $0x7c8] sm:$0xff]
    %v348 = vld [vmem:[#allocation5 + $0x7d0] sm:$0xff]
    %v349 = vld [vmem:[#allocation5 + $0x7d8] sm:$0xff]
    %v350 = vld [vmem:[#allocation5 + $0x7e0] sm:$0xff]
    %v351 = vld [vmem:[#allocation5 + $0x7e8] sm:$0xff]
    %v352 = vld [vmem:[#allocation5 + $0x7f0] sm:$0xff]
    %v353 = vld [vmem:[#allocation5 + $0x7f8] sm:$0xff]
    %v354 = vld [vmem:[#allocation5 + $0x800] sm:$0xff]
    %v355 = vld [vmem:[#allocation5 + $0x808] sm:$0xff]
    %v356 = vld [vmem:[#allocation5 + $0x810] sm:$0xff]
    %v357 = vld [vmem:[#allocation5 + $0x818] sm:$0xff]
    %v358 = vld [vmem:[#allocation5 + $0x820] sm:$0xff]
    %v359 = vld [vmem:[#allocation5 + $0x828] sm:$0xff]
    %v360 = vld [vmem:[#allocation5 + $0x830] sm:$0xff]
    %v361 = vld [vmem:[#allocation5 + $0x838] sm:$0xff]
    %v362 = vld [vmem:[#allocation5 + $0x840] sm:$0xff]
    %v363 = vld [vmem:[#allocation5 + $0x848] sm:$0xff]
    %v364 = vld [vmem:[#allocation5 + $0x850] sm:$0xff]
    %v365 = vld [vmem:[#allocation5 + $0x858] sm:$0xff]
    %v366 = vld [vmem:[#allocation5 + $0x860] sm:$0xff]
    %v367 = vld [vmem:[#allocation5 + $0x868] sm:$0xff]
    %v368 = vld [vmem:[#allocation5 + $0x870] sm:$0xff]
    %v369 = vld [vmem:[#allocation5 + $0x878] sm:$0xff]
    %v370 = vld [vmem:[#allocation5 + $0x880] sm:$0xff]
    %v371 = vld [vmem:[#allocation5 + $0x888] sm:$0xff]
    %v372 = vld [vmem:[#allocation5 + $0x890] sm:$0xff]
    %v373 = vld [vmem:[#allocation5 + $0x898] sm:$0xff]
    %v374 = vld [vmem:[#allocation5 + $0x8a0] sm:$0xff]
    %v375 = vld [vmem:[#allocation5 + $0x8a8] sm:$0xff]
    %v376 = vld [vmem:[#allocation5 + $0x8b0] sm:$0xff]
    %v377 = vld [vmem:[#allocation5 + $0x8b8] sm:$0xff]
    %v378 = vld [vmem:[#allocation5 + $0x8c0] sm:$0xff]
    %v379 = vld [vmem:[#allocation5 + $0x8c8] sm:$0xff]
    %v380 = vld [vmem:[#allocation5 + $0x8d0] sm:$0xff]
    %v381 = vld [vmem:[#allocation5 + $0x8d8] sm:$0xff]
    %v382 = vld [vmem:[#allocation5 + $0x8e0] sm:$0xff]
    %v383 = vld [vmem:[#allocation5 + $0x8e8] sm:$0xff]
    %v384 = vld [vmem:[#allocation5 + $0x8f0] sm:$0xff]
    %v385 = vld [vmem:[#allocation5 + $0x8f8] sm:$0xff]
    %v386 = vld [vmem:[#allocation7] sm:$0x3f]
    %v388 = vperm.slane %v386, 0
    %v389 = vperm.slane %v386, 1
    %v390 = vperm.slane %v386, 2
    %v391 = vperm.slane %v386, 3
    %v392 = vperm.slane %v386, 4
    %v393 = vperm.slane %v386, 5
    %v688 = vunpack.c.l.b16 %v98
    %v689 = vunpack.c.h.b16 %v98
    %v690 = vunpack.c.l.b16 %v99
    %v691 = vunpack.c.h.b16 %v99
    %v692 = vunpack.c.l.b16 %v100
    %v693 = vunpack.c.h.b16 %v100
    %v694 = vunpack.c.l.b16 %v101
    %v695 = vunpack.c.h.b16 %v101
    %v696 = vunpack.c.l.b16 %v102
    %v697 = vunpack.c.h.b16 %v102
    %v698 = vunpack.c.l.b16 %v103
    %v699 = vunpack.c.h.b16 %v103
    %v700 = vunpack.c.l.b16 %v104
    %v701 = vunpack.c.h.b16 %v104
    %v702 = vunpack.c.l.b16 %v105
    %v703 = vunpack.c.h.b16 %v105
    %v704 = vunpack.c.l.b16 %v106
    %v705 = vunpack.c.h.b16 %v106
    %v706 = vunpack.c.l.b16 %v107
    %v707 = vunpack.c.h.b16 %v107
    %v708 = vunpack.c.l.b16 %v108
    %v709 = vunpack.c.h.b16 %v108
    %v710 = vunpack.c.l.b16 %v109
    %v711 = vunpack.c.h.b16 %v109
    %v712 = vunpack.c.l.b16 %v110
    %v713 = vunpack.c.h.b16 %v110
    %v714 = vunpack.c.l.b16 %v111
    %v715 = vunpack.c.h.b16 %v111
    %v716 = vunpack.c.l.b16 %v112
    %v717 = vunpack.c.h.b16 %v112
    %v718 = vunpack.c.l.b16 %v113
    %v719 = vunpack.c.h.b16 %v113
    %v720 = vunpack.c.l.b16 %v114
    %v721 = vunpack.c.h.b16 %v114
    %v722 = vunpack.c.l.b16 %v115
    %v723 = vunpack.c.h.b16 %v115
    %v724 = vunpack.c.l.b16 %v116
    %v725 = vunpack.c.h.b16 %v116
    %v726 = vunpack.c.l.b16 %v117
    %v727 = vunpack.c.h.b16 %v117
    %v728 = vunpack.c.l.b16 %v118
    %v729 = vunpack.c.h.b16 %v118
    %v730 = vunpack.c.l.b16 %v119
    %v731 = vunpack.c.h.b16 %v119
    %v732 = vunpack.c.l.b16 %v120
    %v733 = vunpack.c.h.b16 %v120
    %v734 = vunpack.c.l.b16 %v121
    %v735 = vunpack.c.h.b16 %v121
    %v736 = vunpack.c.l.b16 %v122
    %v737 = vunpack.c.h.b16 %v122
    %v738 = vunpack.c.l.b16 %v123
    %v739 = vunpack.c.h.b16 %v123
    %v740 = vunpack.c.l.b16 %v124
    %v741 = vunpack.c.h.b16 %v124
    %v742 = vunpack.c.l.b16 %v125
    %v743 = vunpack.c.h.b16 %v125
    %v744 = vunpack.c.l.b16 %v126
    %v745 = vunpack.c.h.b16 %v126
    %v746 = vunpack.c.l.b16 %v127
    %v747 = vunpack.c.h.b16 %v127
    %v748 = vunpack.c.l.b16 %v128
    %v749 = vunpack.c.h.b16 %v128
    %v750 = vunpack.c.l.b16 %v129
    %v751 = vunpack.c.h.b16 %v129
    %v752 = vunpack.c.l.b16 %v130
    %v753 = vunpack.c.h.b16 %v130
    %v754 = vunpack.c.l.b16 %v131
    %v755 = vunpack.c.h.b16 %v131
    %v756 = vunpack.c.l.b16 %v132
    %v757 = vunpack.c.h.b16 %v132
    %v758 = vunpack.c.l.b16 %v133
    %v759 = vunpack.c.h.b16 %v133
    %v760 = vunpack.c.l.b16 %v134
    %v761 = vunpack.c.h.b16 %v134
    %v762 = vunpack.c.l.b16 %v135
    %v763 = vunpack.c.h.b16 %v135
    %v764 = vunpack.c.l.b16 %v136
    %v765 = vunpack.c.h.b16 %v136
    %v766 = vunpack.c.l.b16 %v137
    %v767 = vunpack.c.h.b16 %v137
    %v768 = vunpack.c.l.b16 %v138
    %v769 = vunpack.c.h.b16 %v138
    %v770 = vunpack.c.l.b16 %v139
    %v771 = vunpack.c.h.b16 %v139
    %v772 = vunpack.c.l.b16 %v140
    %v773 = vunpack.c.h.b16 %v140
    %v774 = vunpack.c.l.b16 %v141
    %v775 = vunpack.c.h.b16 %v141
    %v776 = vunpack.c.l.b16 %v142
    %v777 = vunpack.c.h.b16 %v142
    %v778 = vunpack.c.l.b16 %v143
    %v779 = vunpack.c.h.b16 %v143
    %v780 = vunpack.c.l.b16 %v144
    %v781 = vunpack.c.h.b16 %v144
    %v782 = vunpack.c.l.b16 %v145
    %v783 = vunpack.c.h.b16 %v145
    %v784 = vunpack.c.l.b16 %v146
    %v785 = vunpack.c.h.b16 %v146
    %v786 = vunpack.c.l.b16 %v147
    %v787 = vunpack.c.h.b16 %v147
    %v788 = vunpack.c.l.b16 %v148
    %v789 = vunpack.c.h.b16 %v148
    %v790 = vunpack.c.l.b16 %v149
    %v791 = vunpack.c.h.b16 %v149
    %v792 = vunpack.c.l.b16 %v150
    %v793 = vunpack.c.h.b16 %v150
    %v794 = vunpack.c.l.b16 %v151
    %v795 = vunpack.c.h.b16 %v151
    %v796 = vunpack.c.l.b16 %v152
    %v797 = vunpack.c.h.b16 %v152
    %v798 = vunpack.c.l.b16 %v153
    %v799 = vunpack.c.h.b16 %v153
    %v800 = vunpack.c.l.b16 %v154
    %v801 = vunpack.c.h.b16 %v154
    %v802 = vunpack.c.l.b16 %v155
    %v803 = vunpack.c.h.b16 %v155
    %v804 = vunpack.c.l.b16 %v156
    %v805 = vunpack.c.h.b16 %v156
    %v806 = vunpack.c.l.b16 %v157
    %v807 = vunpack.c.h.b16 %v157
    %v808 = vunpack.c.l.b16 %v158
    %v809 = vunpack.c.h.b16 %v158
    %v810 = vunpack.c.l.b16 %v159
    %v811 = vunpack.c.h.b16 %v159
    %v812 = vunpack.c.l.b16 %v160
    %v813 = vunpack.c.h.b16 %v160
    %v814 = vunpack.c.l.b16 %v161
    %v815 = vunpack.c.h.b16 %v161
    %v816 = vunpack.c.l.b16 %v162
    %v817 = vunpack.c.h.b16 %v162
    %v818 = vunpack.c.l.b16 %v163
    %v819 = vunpack.c.h.b16 %v163
    %v820 = vunpack.c.l.b16 %v164
    %v821 = vunpack.c.h.b16 %v164
    %v822 = vunpack.c.l.b16 %v165
    %v823 = vunpack.c.h.b16 %v165
    %v824 = vunpack.c.l.b16 %v166
    %v825 = vunpack.c.h.b16 %v166
    %v826 = vunpack.c.l.b16 %v167
    %v827 = vunpack.c.h.b16 %v167
    %v828 = vunpack.c.l.b16 %v168
    %v829 = vunpack.c.h.b16 %v168
    %v830 = vunpack.c.l.b16 %v169
    %v831 = vunpack.c.h.b16 %v169
    %v832 = vunpack.c.l.b16 %v170
    %v833 = vunpack.c.h.b16 %v170
    %v834 = vunpack.c.l.b16 %v171
    %v835 = vunpack.c.h.b16 %v171
    %v836 = vunpack.c.l.b16 %v172
    %v837 = vunpack.c.h.b16 %v172
    %v838 = vunpack.c.l.b16 %v173
    %v839 = vunpack.c.h.b16 %v173
    %v840 = vunpack.c.l.b16 %v174
    %v841 = vunpack.c.h.b16 %v174
    %v842 = vunpack.c.l.b16 %v175
    %v843 = vunpack.c.h.b16 %v175
    %v844 = vunpack.c.l.b16 %v176
    %v845 = vunpack.c.h.b16 %v176
    %v846 = vunpack.c.l.b16 %v177
    %v847 = vunpack.c.h.b16 %v177
    %v848 = vunpack.c.l.b16 %v178
    %v849 = vunpack.c.h.b16 %v178
    %v850 = vunpack.c.l.b16 %v179
    %v851 = vunpack.c.h.b16 %v179
    %v852 = vunpack.c.l.b16 %v180
    %v853 = vunpack.c.h.b16 %v180
    %v854 = vunpack.c.l.b16 %v181
    %v855 = vunpack.c.h.b16 %v181
    %v856 = vunpack.c.l.b16 %v182
    %v857 = vunpack.c.h.b16 %v182
    %v858 = vunpack.c.l.b16 %v183
    %v859 = vunpack.c.h.b16 %v183
    %v860 = vunpack.c.l.b16 %v184
    %v861 = vunpack.c.h.b16 %v184
    %v862 = vunpack.c.l.b16 %v185
    %v863 = vunpack.c.h.b16 %v185
    %v864 = vunpack.c.l.b16 %v186
    %v865 = vunpack.c.h.b16 %v186
    %v866 = vunpack.c.l.b16 %v187
    %v867 = vunpack.c.h.b16 %v187
    %v868 = vunpack.c.l.b16 %v188
    %v869 = vunpack.c.h.b16 %v188
    %v870 = vunpack.c.l.b16 %v189
    %v871 = vunpack.c.h.b16 %v189
    %v872 = vunpack.c.l.b16 %v190
    %v873 = vunpack.c.h.b16 %v190
    %v874 = vunpack.c.l.b16 %v191
    %v875 = vunpack.c.h.b16 %v191
    %v876 = vunpack.c.l.b16 %v192
    %v877 = vunpack.c.h.b16 %v192
    %v878 = vunpack.c.l.b16 %v193
    %v879 = vunpack.c.h.b16 %v193
    %v880 = vunpack.c.l.b16 %v194
    %v881 = vunpack.c.h.b16 %v194
    %v882 = vunpack.c.l.b16 %v195
    %v883 = vunpack.c.h.b16 %v195
    %v884 = vunpack.c.l.b16 %v196
    %v885 = vunpack.c.h.b16 %v196
    %v886 = vunpack.c.l.b16 %v197
    %v887 = vunpack.c.h.b16 %v197
    %v888 = vunpack.c.l.b16 %v198
    %v889 = vunpack.c.h.b16 %v198
    %v890 = vunpack.c.l.b16 %v199
    %v891 = vunpack.c.h.b16 %v199
    %v892 = vunpack.c.l.b16 %v200
    %v893 = vunpack.c.h.b16 %v200
    %v894 = vunpack.c.l.b16 %v201
    %v895 = vunpack.c.h.b16 %v201
    %v896 = vunpack.c.l.b16 %v202
    %v897 = vunpack.c.h.b16 %v202
    %v898 = vunpack.c.l.b16 %v203
    %v899 = vunpack.c.h.b16 %v203
    %v900 = vunpack.c.l.b16 %v204
    %v901 = vunpack.c.h.b16 %v204
    %v902 = vunpack.c.l.b16 %v205
    %v903 = vunpack.c.h.b16 %v205
    %v904 = vunpack.c.l.b16 %v206
    %v905 = vunpack.c.h.b16 %v206
    %v906 = vunpack.c.l.b16 %v207
    %v907 = vunpack.c.h.b16 %v207
    %v908 = vunpack.c.l.b16 %v208
    %v909 = vunpack.c.h.b16 %v208
    %v910 = vunpack.c.l.b16 %v209
    %v911 = vunpack.c.h.b16 %v209
    %v912 = vunpack.c.l.b16 %v210
    %v913 = vunpack.c.h.b16 %v210
    %v914 = vunpack.c.l.b16 %v211
    %v915 = vunpack.c.h.b16 %v211
    %v916 = vunpack.c.l.b16 %v212
    %v917 = vunpack.c.h.b16 %v212
    %v918 = vunpack.c.l.b16 %v213
    %v919 = vunpack.c.h.b16 %v213
    %v920 = vunpack.c.l.b16 %v214
    %v921 = vunpack.c.h.b16 %v214
    %v922 = vunpack.c.l.b16 %v215
    %v923 = vunpack.c.h.b16 %v215
    %v924 = vunpack.c.l.b16 %v216
    %v925 = vunpack.c.h.b16 %v216
    %v926 = vunpack.c.l.b16 %v217
    %v927 = vunpack.c.h.b16 %v217
    %v928 = vunpack.c.l.b16 %v218
    %v929 = vunpack.c.h.b16 %v218
    %v930 = vunpack.c.l.b16 %v219
    %v931 = vunpack.c.h.b16 %v219
    %v932 = vunpack.c.l.b16 %v220
    %v933 = vunpack.c.h.b16 %v220
    %v934 = vunpack.c.l.b16 %v221
    %v935 = vunpack.c.h.b16 %v221
    %v936 = vunpack.c.l.b16 %v222
    %v937 = vunpack.c.h.b16 %v222
    %v938 = vunpack.c.l.b16 %v223
    %v939 = vunpack.c.h.b16 %v223
    %v940 = vunpack.c.l.b16 %v224
    %v941 = vunpack.c.h.b16 %v224
    %v942 = vunpack.c.l.b16 %v225
    %v943 = vunpack.c.h.b16 %v225
    %v944 = vunpack.c.l.b16 %v226
    %v945 = vunpack.c.h.b16 %v226
    %v946 = vunpack.c.l.b16 %v227
    %v947 = vunpack.c.h.b16 %v227
    %v948 = vunpack.c.l.b16 %v228
    %v949 = vunpack.c.h.b16 %v228
    %v950 = vunpack.c.l.b16 %v229
    %v951 = vunpack.c.h.b16 %v229
    %v952 = vunpack.c.l.b16 %v230
    %v953 = vunpack.c.h.b16 %v230
    %v954 = vunpack.c.l.b16 %v231
    %v955 = vunpack.c.h.b16 %v231
    %v956 = vunpack.c.l.b16 %v232
    %v957 = vunpack.c.h.b16 %v232
    %v958 = vunpack.c.l.b16 %v233
    %v959 = vunpack.c.h.b16 %v233
    %v960 = vunpack.c.l.b16 %v234
    %v961 = vunpack.c.h.b16 %v234
    %v962 = vunpack.c.l.b16 %v235
    %v963 = vunpack.c.h.b16 %v235
    %v964 = vunpack.c.l.b16 %v236
    %v965 = vunpack.c.h.b16 %v236
    %v966 = vunpack.c.l.b16 %v237
    %v967 = vunpack.c.h.b16 %v237
    %v968 = vunpack.c.l.b16 %v238
    %v969 = vunpack.c.h.b16 %v238
    %v970 = vunpack.c.l.b16 %v239
    %v971 = vunpack.c.h.b16 %v239
    %v972 = vunpack.c.l.b16 %v240
    %v973 = vunpack.c.h.b16 %v240
    %v974 = vunpack.c.l.b16 %v241
    %v975 = vunpack.c.h.b16 %v241
    %v976 = vunpack.c.l.b16 %v242
    %v977 = vunpack.c.h.b16 %v242
    %v978 = vunpack.c.l.b16 %v243
    %v979 = vunpack.c.h.b16 %v243
    %v980 = vunpack.c.l.b16 %v244
    %v981 = vunpack.c.h.b16 %v244
    %v982 = vunpack.c.l.b16 %v245
    %v983 = vunpack.c.h.b16 %v245
    %v984 = vunpack.c.l.b16 %v246
    %v985 = vunpack.c.h.b16 %v246
    %v986 = vunpack.c.l.b16 %v247
    %v987 = vunpack.c.h.b16 %v247
    %v988 = vunpack.c.l.b16 %v248
    %v989 = vunpack.c.h.b16 %v248
    %v990 = vunpack.c.l.b16 %v249
    %v991 = vunpack.c.h.b16 %v249
    %v992 = vunpack.c.l.b16 %v250
    %v993 = vunpack.c.h.b16 %v250
    %v994 = vunpack.c.l.b16 %v251
    %v995 = vunpack.c.h.b16 %v251
    %v996 = vunpack.c.l.b16 %v252
    %v997 = vunpack.c.h.b16 %v252
    %v998 = vunpack.c.l.b16 %v253
    %v999 = vunpack.c.h.b16 %v253
    %v1000 = vunpack.c.l.b16 %v254
    %v1001 = vunpack.c.h.b16 %v254
    %v1002 = vunpack.c.l.b16 %v255
    %v1003 = vunpack.c.h.b16 %v255
    %v1004 = vunpack.c.l.b16 %v256
    %v1005 = vunpack.c.h.b16 %v256
    %v1006 = vunpack.c.l.b16 %v257
    %v1007 = vunpack.c.h.b16 %v257
    %v1008 = vunpack.c.l.b16 %v258
    %v1009 = vunpack.c.h.b16 %v258
    %v1010 = vunpack.c.l.b16 %v259
    %v1011 = vunpack.c.h.b16 %v259
    %v1012 = vunpack.c.l.b16 %v260
    %v1013 = vunpack.c.h.b16 %v260
    %v1014 = vunpack.c.l.b16 %v261
    %v1015 = vunpack.c.h.b16 %v261
    %v1016 = vunpack.c.l.b16 %v262
    %v1017 = vunpack.c.h.b16 %v262
    %v1018 = vunpack.c.l.b16 %v263
    %v1019 = vunpack.c.h.b16 %v263
    %v1020 = vunpack.c.l.b16 %v264
    %v1021 = vunpack.c.h.b16 %v264
    %v1022 = vunpack.c.l.b16 %v265
    %v1023 = vunpack.c.h.b16 %v265
    %v1024 = vunpack.c.l.b16 %v266
    %v1025 = vunpack.c.h.b16 %v266
    %v1026 = vunpack.c.l.b16 %v267
    %v1027 = vunpack.c.h.b16 %v267
    %v1028 = vunpack.c.l.b16 %v268
    %v1029 = vunpack.c.h.b16 %v268
    %v1030 = vunpack.c.l.b16 %v269
    %v1031 = vunpack.c.h.b16 %v269
    %v1032 = vunpack.c.l.b16 %v270
    %v1033 = vunpack.c.h.b16 %v270
    %v1034 = vunpack.c.l.b16 %v271
    %v1035 = vunpack.c.h.b16 %v271
    %v1036 = vunpack.c.l.b16 %v272
    %v1037 = vunpack.c.h.b16 %v272
    %v1038 = vunpack.c.l.b16 %v273
    %v1039 = vunpack.c.h.b16 %v273
    %v1040 = vunpack.c.l.b16 %v274
    %v1041 = vunpack.c.h.b16 %v274
    %v1042 = vunpack.c.l.b16 %v275
    %v1043 = vunpack.c.h.b16 %v275
    %v1044 = vunpack.c.l.b16 %v276
    %v1045 = vunpack.c.h.b16 %v276
    %v1046 = vunpack.c.l.b16 %v277
    %v1047 = vunpack.c.h.b16 %v277
    %v1048 = vunpack.c.l.b16 %v278
    %v1049 = vunpack.c.h.b16 %v278
    %v1050 = vunpack.c.l.b16 %v279
    %v1051 = vunpack.c.h.b16 %v279
    %v1052 = vunpack.c.l.b16 %v280
    %v1053 = vunpack.c.h.b16 %v280
    %v1054 = vunpack.c.l.b16 %v281
    %v1055 = vunpack.c.h.b16 %v281
    %v1056 = vunpack.c.l.b16 %v282
    %v1057 = vunpack.c.h.b16 %v282
    %v1058 = vunpack.c.l.b16 %v283
    %v1059 = vunpack.c.h.b16 %v283
    %v1060 = vunpack.c.l.b16 %v284
    %v1061 = vunpack.c.h.b16 %v284
    %v1062 = vunpack.c.l.b16 %v285
    %v1063 = vunpack.c.h.b16 %v285
    %v1064 = vunpack.c.l.b16 %v286
    %v1065 = vunpack.c.h.b16 %v286
    %v1066 = vunpack.c.l.b16 %v287
    %v1067 = vunpack.c.h.b16 %v287
    %v1068 = vunpack.c.l.b16 %v288
    %v1069 = vunpack.c.h.b16 %v288
    %v1070 = vunpack.c.l.b16 %v289
    %v1071 = vunpack.c.h.b16 %v289
    %v1072 = vunpack.c.l.b16 %v290
    %v1073 = vunpack.c.h.b16 %v290
    %v1074 = vunpack.c.l.b16 %v291
    %v1075 = vunpack.c.h.b16 %v291
    %v1076 = vunpack.c.l.b16 %v292
    %v1077 = vunpack.c.h.b16 %v292
    %v1078 = vunpack.c.l.b16 %v293
    %v1079 = vunpack.c.h.b16 %v293
    %v1080 = vunpack.c.l.b16 %v294
    %v1081 = vunpack.c.h.b16 %v294
    %v1082 = vunpack.c.l.b16 %v295
    %v1083 = vunpack.c.h.b16 %v295
    %v1084 = vunpack.c.l.b16 %v296
    %v1085 = vunpack.c.h.b16 %v296
    %v1086 = vunpack.c.l.b16 %v297
    %v1087 = vunpack.c.h.b16 %v297
    %v1088 = vunpack.c.l.b16 %v298
    %v1089 = vunpack.c.h.b16 %v298
    %v1090 = vunpack.c.l.b16 %v299
    %v1091 = vunpack.c.h.b16 %v299
    %v1092 = vunpack.c.l.b16 %v300
    %v1093 = vunpack.c.h.b16 %v300
    %v1094 = vunpack.c.l.b16 %v301
    %v1095 = vunpack.c.h.b16 %v301
    %v1096 = vunpack.c.l.b16 %v302
    %v1097 = vunpack.c.h.b16 %v302
    %v1098 = vunpack.c.l.b16 %v303
    %v1099 = vunpack.c.h.b16 %v303
    %v1100 = vunpack.c.l.b16 %v304
    %v1101 = vunpack.c.h.b16 %v304
    %v1102 = vunpack.c.l.b16 %v305
    %v1103 = vunpack.c.h.b16 %v305
    %v1104 = vunpack.c.l.b16 %v306
    %v1105 = vunpack.c.h.b16 %v306
    %v1106 = vunpack.c.l.b16 %v307
    %v1107 = vunpack.c.h.b16 %v307
    %v1108 = vunpack.c.l.b16 %v308
    %v1109 = vunpack.c.h.b16 %v308
    %v1110 = vunpack.c.l.b16 %v309
    %v1111 = vunpack.c.h.b16 %v309
    %v1112 = vunpack.c.l.b16 %v310
    %v1113 = vunpack.c.h.b16 %v310
    %v1114 = vunpack.c.l.b16 %v311
    %v1115 = vunpack.c.h.b16 %v311
    %v1116 = vunpack.c.l.b16 %v312
    %v1117 = vunpack.c.h.b16 %v312
    %v1118 = vunpack.c.l.b16 %v313
    %v1119 = vunpack.c.h.b16 %v313
    %v1120 = vunpack.c.l.b16 %v314
    %v1121 = vunpack.c.h.b16 %v314
    %v1122 = vunpack.c.l.b16 %v315
    %v1123 = vunpack.c.h.b16 %v315
    %v1124 = vunpack.c.l.b16 %v316
    %v1125 = vunpack.c.h.b16 %v316
    %v1126 = vunpack.c.l.b16 %v317
    %v1127 = vunpack.c.h.b16 %v317
    %v1128 = vunpack.c.l.b16 %v318
    %v1129 = vunpack.c.h.b16 %v318
    %v1130 = vunpack.c.l.b16 %v319
    %v1131 = vunpack.c.h.b16 %v319
    %v1132 = vunpack.c.l.b16 %v320
    %v1133 = vunpack.c.h.b16 %v320
    %v1134 = vunpack.c.l.b16 %v321
    %v1135 = vunpack.c.h.b16 %v321
    %v1136 = vunpack.c.l.b16 %v322
    %v1137 = vunpack.c.h.b16 %v322
    %v1138 = vunpack.c.l.b16 %v323
    %v1139 = vunpack.c.h.b16 %v323
    %v1140 = vunpack.c.l.b16 %v324
    %v1141 = vunpack.c.h.b16 %v324
    %v1142 = vunpack.c.l.b16 %v325
    %v1143 = vunpack.c.h.b16 %v325
    %v1144 = vunpack.c.l.b16 %v326
    %v1145 = vunpack.c.h.b16 %v326
    %v1146 = vunpack.c.l.b16 %v327
    %v1147 = vunpack.c.h.b16 %v327
    %v1148 = vunpack.c.l.b16 %v328
    %v1149 = vunpack.c.h.b16 %v328
    %v1150 = vunpack.c.l.b16 %v329
    %v1151 = vunpack.c.h.b16 %v329
    %v1152 = vunpack.c.l.b16 %v330
    %v1153 = vunpack.c.h.b16 %v330
    %v1154 = vunpack.c.l.b16 %v331
    %v1155 = vunpack.c.h.b16 %v331
    %v1156 = vunpack.c.l.b16 %v332
    %v1157 = vunpack.c.h.b16 %v332
    %v1158 = vunpack.c.l.b16 %v333
    %v1159 = vunpack.c.h.b16 %v333
    %v1160 = vunpack.c.l.b16 %v334
    %v1161 = vunpack.c.h.b16 %v334
    %v1162 = vunpack.c.l.b16 %v335
    %v1163 = vunpack.c.h.b16 %v335
    %v1164 = vunpack.c.l.b16 %v336
    %v1165 = vunpack.c.h.b16 %v336
    %v1166 = vunpack.c.l.b16 %v337
    %v1167 = vunpack.c.h.b16 %v337
    %v1168 = vunpack.c.l.b16 %v338
    %v1169 = vunpack.c.h.b16 %v338
    %v1170 = vunpack.c.l.b16 %v339
    %v1171 = vunpack.c.h.b16 %v339
    %v1172 = vunpack.c.l.b16 %v340
    %v1173 = vunpack.c.h.b16 %v340
    %v1174 = vunpack.c.l.b16 %v341
    %v1175 = vunpack.c.h.b16 %v341
    %v1176 = vunpack.c.l.b16 %v342
    %v1177 = vunpack.c.h.b16 %v342
    %v1178 = vunpack.c.l.b16 %v343
    %v1179 = vunpack.c.h.b16 %v343
    %v1180 = vunpack.c.l.b16 %v344
    %v1181 = vunpack.c.h.b16 %v344
    %v1182 = vunpack.c.l.b16 %v345
    %v1183 = vunpack.c.h.b16 %v345
    %v1184 = vunpack.c.l.b16 %v346
    %v1185 = vunpack.c.h.b16 %v346
    %v1186 = vunpack.c.l.b16 %v347
    %v1187 = vunpack.c.h.b16 %v347
    %v1188 = vunpack.c.l.b16 %v348
    %v1189 = vunpack.c.h.b16 %v348
    %v1190 = vunpack.c.l.b16 %v349
    %v1191 = vunpack.c.h.b16 %v349
    %v1192 = vunpack.c.l.b16 %v350
    %v1193 = vunpack.c.h.b16 %v350
    %v1194 = vunpack.c.l.b16 %v351
    %v1195 = vunpack.c.h.b16 %v351
    %v1196 = vunpack.c.l.b16 %v352
    %v1197 = vunpack.c.h.b16 %v352
    %v1198 = vunpack.c.l.b16 %v353
    %v1199 = vunpack.c.h.b16 %v353
    %v1200 = vunpack.c.l.b16 %v354
    %v1201 = vunpack.c.h.b16 %v354
    %v1202 = vunpack.c.l.b16 %v355
    %v1203 = vunpack.c.h.b16 %v355
    %v1204 = vunpack.c.l.b16 %v356
    %v1205 = vunpack.c.h.b16 %v356
    %v1206 = vunpack.c.l.b16 %v357
    %v1207 = vunpack.c.h.b16 %v357
    %v1208 = vunpack.c.l.b16 %v358
    %v1209 = vunpack.c.h.b16 %v358
    %v1210 = vunpack.c.l.b16 %v359
    %v1211 = vunpack.c.h.b16 %v359
    %v1212 = vunpack.c.l.b16 %v360
    %v1213 = vunpack.c.h.b16 %v360
    %v1214 = vunpack.c.l.b16 %v361
    %v1215 = vunpack.c.h.b16 %v361
    %v1216 = vunpack.c.l.b16 %v362
    %v1217 = vunpack.c.h.b16 %v362
    %v1218 = vunpack.c.l.b16 %v363
    %v1219 = vunpack.c.h.b16 %v363
    %v1220 = vunpack.c.l.b16 %v364
    %v1221 = vunpack.c.h.b16 %v364
    %v1222 = vunpack.c.l.b16 %v365
    %v1223 = vunpack.c.h.b16 %v365
    %v1224 = vunpack.c.l.b16 %v366
    %v1225 = vunpack.c.h.b16 %v366
    %v1226 = vunpack.c.l.b16 %v367
    %v1227 = vunpack.c.h.b16 %v367
    %v1228 = vunpack.c.l.b16 %v368
    %v1229 = vunpack.c.h.b16 %v368
    %v1230 = vunpack.c.l.b16 %v369
    %v1231 = vunpack.c.h.b16 %v369
    %v1232 = vunpack.c.l.b16 %v370
    %v1233 = vunpack.c.h.b16 %v370
    %v1234 = vunpack.c.l.b16 %v371
    %v1235 = vunpack.c.h.b16 %v371
    %v1236 = vunpack.c.l.b16 %v372
    %v1237 = vunpack.c.h.b16 %v372
    %v1238 = vunpack.c.l.b16 %v373
    %v1239 = vunpack.c.h.b16 %v373
    %v1240 = vunpack.c.l.b16 %v374
    %v1241 = vunpack.c.h.b16 %v374
    %v1242 = vunpack.c.l.b16 %v375
    %v1243 = vunpack.c.h.b16 %v375
    %v1244 = vunpack.c.l.b16 %v376
    %v1245 = vunpack.c.h.b16 %v376
    %v1246 = vunpack.c.l.b16 %v377
    %v1247 = vunpack.c.h.b16 %v377
    %v1248 = vunpack.c.l.b16 %v378
    %v1249 = vunpack.c.h.b16 %v378
    %v1250 = vunpack.c.l.b16 %v379
    %v1251 = vunpack.c.h.b16 %v379
    %v1252 = vunpack.c.l.b16 %v380
    %v1253 = vunpack.c.h.b16 %v380
    %v1254 = vunpack.c.l.b16 %v381
    %v1255 = vunpack.c.h.b16 %v381
    %v1256 = vunpack.c.l.b16 %v382
    %v1257 = vunpack.c.h.b16 %v382
    %v1258 = vunpack.c.l.b16 %v383
    %v1259 = vunpack.c.h.b16 %v383
    %v1260 = vunpack.c.l.b16 %v384
    %v1261 = vunpack.c.h.b16 %v384
    %v1262 = vunpack.c.l.b16 %v385
    %v1263 = vunpack.c.h.b16 %v385
    %v1264 = vpack.c.b16 %v694, %v688
    %v1265 = vpack.c.b16 %v695, %v689
    %v1266 = vpack.c.b16 %v696, %v690
    %v1267 = vpack.c.b16 %v697, %v691
    %v1268 = vpack.c.b16 %v698, %v692
    %v1269 = vpack.c.b16 %v699, %v693
    %v1270 = vpack.c.b16 %v706, %v700
    %v1271 = vpack.c.b16 %v707, %v701
    %v1272 = vpack.c.b16 %v708, %v702
    %v1273 = vpack.c.b16 %v709, %v703
    %v1274 = vpack.c.b16 %v710, %v704
    %v1275 = vpack.c.b16 %v711, %v705
    %v1276 = vpack.c.b16 %v718, %v712
    %v1277 = vpack.c.b16 %v719, %v713
    %v1278 = vpack.c.b16 %v720, %v714
    %v1279 = vpack.c.b16 %v721, %v715
    %v1280 = vpack.c.b16 %v722, %v716
    %v1281 = vpack.c.b16 %v723, %v717
    %v1282 = vpack.c.b16 %v730, %v724
    %v1283 = vpack.c.b16 %v731, %v725
    %v1284 = vpack.c.b16 %v732, %v726
    %v1285 = vpack.c.b16 %v733, %v727
    %v1286 = vpack.c.b16 %v734, %v728
    %v1287 = vpack.c.b16 %v735, %v729
    %v1288 = vpack.c.b16 %v742, %v736
    %v1289 = vpack.c.b16 %v743, %v737
    %v1290 = vpack.c.b16 %v744, %v738
    %v1291 = vpack.c.b16 %v745, %v739
    %v1292 = vpack.c.b16 %v746, %v740
    %v1293 = vpack.c.b16 %v747, %v741
    %v1294 = vpack.c.b16 %v754, %v748
    %v1295 = vpack.c.b16 %v755, %v749
    %v1296 = vpack.c.b16 %v756, %v750
    %v1297 = vpack.c.b16 %v757, %v751
    %v1298 = vpack.c.b16 %v758, %v752
    %v1299 = vpack.c.b16 %v759, %v753
    %v1300 = vpack.c.b16 %v766, %v760
    %v1301 = vpack.c.b16 %v767, %v761
    %v1302 = vpack.c.b16 %v768, %v762
    %v1303 = vpack.c.b16 %v769, %v763
    %v1304 = vpack.c.b16 %v770, %v764
    %v1305 = vpack.c.b16 %v771, %v765
    %v1306 = vpack.c.b16 %v778, %v772
    %v1307 = vpack.c.b16 %v779, %v773
    %v1308 = vpack.c.b16 %v780, %v774
    %v1309 = vpack.c.b16 %v781, %v775
    %v1310 = vpack.c.b16 %v782, %v776
    %v1311 = vpack.c.b16 %v783, %v777
    %v1312 = vpack.c.b16 %v790, %v784
    %v1313 = vpack.c.b16 %v791, %v785
    %v1314 = vpack.c.b16 %v792, %v786
    %v1315 = vpack.c.b16 %v793, %v787
    %v1316 = vpack.c.b16 %v794, %v788
    %v1317 = vpack.c.b16 %v795, %v789
    %v1318 = vpack.c.b16 %v802, %v796
    %v1319 = vpack.c.b16 %v803, %v797
    %v1320 = vpack.c.b16 %v804, %v798
    %v1321 = vpack.c.b16 %v805, %v799
    %v1322 = vpack.c.b16 %v806, %v800
    %v1323 = vpack.c.b16 %v807, %v801
    %v1324 = vpack.c.b16 %v814, %v808
    %v1325 = vpack.c.b16 %v815, %v809
    %v1326 = vpack.c.b16 %v816, %v810
    %v1327 = vpack.c.b16 %v817, %v811
    %v1328 = vpack.c.b16 %v818, %v812
    %v1329 = vpack.c.b16 %v819, %v813
    %v1330 = vpack.c.b16 %v826, %v820
    %v1331 = vpack.c.b16 %v827, %v821
    %v1332 = vpack.c.b16 %v828, %v822
    %v1333 = vpack.c.b16 %v829, %v823
    %v1334 = vpack.c.b16 %v830, %v824
    %v1335 = vpack.c.b16 %v831, %v825
    %v1336 = vpack.c.b16 %v838, %v832
    %v1337 = vpack.c.b16 %v839, %v833
    %v1338 = vpack.c.b16 %v840, %v834
    %v1339 = vpack.c.b16 %v841, %v835
    %v1340 = vpack.c.b16 %v842, %v836
    %v1341 = vpack.c.b16 %v843, %v837
    %v1342 = vpack.c.b16 %v850, %v844
    %v1343 = vpack.c.b16 %v851, %v845
    %v1344 = vpack.c.b16 %v852, %v846
    %v1345 = vpack.c.b16 %v853, %v847
    %v1346 = vpack.c.b16 %v854, %v848
    %v1347 = vpack.c.b16 %v855, %v849
    %v1348 = vpack.c.b16 %v862, %v856
    %v1349 = vpack.c.b16 %v863, %v857
    %v1350 = vpack.c.b16 %v864, %v858
    %v1351 = vpack.c.b16 %v865, %v859
    %v1352 = vpack.c.b16 %v866, %v860
    %v1353 = vpack.c.b16 %v867, %v861
    %v1354 = vpack.c.b16 %v874, %v868
    %v1355 = vpack.c.b16 %v875, %v869
    %v1356 = vpack.c.b16 %v876, %v870
    %v1357 = vpack.c.b16 %v877, %v871
    %v1358 = vpack.c.b16 %v878, %v872
    %v1359 = vpack.c.b16 %v879, %v873
    %v1360 = vpack.c.b16 %v886, %v880
    %v1361 = vpack.c.b16 %v887, %v881
    %v1362 = vpack.c.b16 %v888, %v882
    %v1363 = vpack.c.b16 %v889, %v883
    %v1364 = vpack.c.b16 %v890, %v884
    %v1365 = vpack.c.b16 %v891, %v885
    %v1366 = vpack.c.b16 %v898, %v892
    %v1367 = vpack.c.b16 %v899, %v893
    %v1368 = vpack.c.b16 %v900, %v894
    %v1369 = vpack.c.b16 %v901, %v895
    %v1370 = vpack.c.b16 %v902, %v896
    %v1371 = vpack.c.b16 %v903, %v897
    %v1372 = vpack.c.b16 %v910, %v904
    %v1373 = vpack.c.b16 %v911, %v905
    %v1374 = vpack.c.b16 %v912, %v906
    %v1375 = vpack.c.b16 %v913, %v907
    %v1376 = vpack.c.b16 %v914, %v908
    %v1377 = vpack.c.b16 %v915, %v909
    %v1378 = vpack.c.b16 %v922, %v916
    %v1379 = vpack.c.b16 %v923, %v917
    %v1380 = vpack.c.b16 %v924, %v918
    %v1381 = vpack.c.b16 %v925, %v919
    %v1382 = vpack.c.b16 %v926, %v920
    %v1383 = vpack.c.b16 %v927, %v921
    %v1384 = vpack.c.b16 %v934, %v928
    %v1385 = vpack.c.b16 %v935, %v929
    %v1386 = vpack.c.b16 %v936, %v930
    %v1387 = vpack.c.b16 %v937, %v931
    %v1388 = vpack.c.b16 %v938, %v932
    %v1389 = vpack.c.b16 %v939, %v933
    %v1390 = vpack.c.b16 %v946, %v940
    %v1391 = vpack.c.b16 %v947, %v941
    %v1392 = vpack.c.b16 %v948, %v942
    %v1393 = vpack.c.b16 %v949, %v943
    %v1394 = vpack.c.b16 %v950, %v944
    %v1395 = vpack.c.b16 %v951, %v945
    %v1396 = vpack.c.b16 %v958, %v952
    %v1397 = vpack.c.b16 %v959, %v953
    %v1398 = vpack.c.b16 %v960, %v954
    %v1399 = vpack.c.b16 %v961, %v955
    %v1400 = vpack.c.b16 %v962, %v956
    %v1401 = vpack.c.b16 %v963, %v957
    %v1402 = vpack.c.b16 %v970, %v964
    %v1403 = vpack.c.b16 %v971, %v965
    %v1404 = vpack.c.b16 %v972, %v966
    %v1405 = vpack.c.b16 %v973, %v967
    %v1406 = vpack.c.b16 %v974, %v968
    %v1407 = vpack.c.b16 %v975, %v969
    %v1408 = vpack.c.b16 %v982, %v976
    %v1409 = vpack.c.b16 %v983, %v977
    %v1410 = vpack.c.b16 %v984, %v978
    %v1411 = vpack.c.b16 %v985, %v979
    %v1412 = vpack.c.b16 %v986, %v980
    %v1413 = vpack.c.b16 %v987, %v981
    %v1414 = vpack.c.b16 %v994, %v988
    %v1415 = vpack.c.b16 %v995, %v989
    %v1416 = vpack.c.b16 %v996, %v990
    %v1417 = vpack.c.b16 %v997, %v991
    %v1418 = vpack.c.b16 %v998, %v992
    %v1419 = vpack.c.b16 %v999, %v993
    %v1420 = vpack.c.b16 %v1006, %v1000
    %v1421 = vpack.c.b16 %v1007, %v1001
    %v1422 = vpack.c.b16 %v1008, %v1002
    %v1423 = vpack.c.b16 %v1009, %v1003
    %v1424 = vpack.c.b16 %v1010, %v1004
    %v1425 = vpack.c.b16 %v1011, %v1005
    %v1426 = vpack.c.b16 %v1018, %v1012
    %v1427 = vpack.c.b16 %v1019, %v1013
    %v1428 = vpack.c.b16 %v1020, %v1014
    %v1429 = vpack.c.b16 %v1021, %v1015
    %v1430 = vpack.c.b16 %v1022, %v1016
    %v1431 = vpack.c.b16 %v1023, %v1017
    %v1432 = vpack.c.b16 %v1030, %v1024
    %v1433 = vpack.c.b16 %v1031, %v1025
    %v1434 = vpack.c.b16 %v1032, %v1026
    %v1435 = vpack.c.b16 %v1033, %v1027
    %v1436 = vpack.c.b16 %v1034, %v1028
    %v1437 = vpack.c.b16 %v1035, %v1029
    %v1438 = vpack.c.b16 %v1042, %v1036
    %v1439 = vpack.c.b16 %v1043, %v1037
    %v1440 = vpack.c.b16 %v1044, %v1038
    %v1441 = vpack.c.b16 %v1045, %v1039
    %v1442 = vpack.c.b16 %v1046, %v1040
    %v1443 = vpack.c.b16 %v1047, %v1041
    %v1444 = vpack.c.b16 %v1054, %v1048
    %v1445 = vpack.c.b16 %v1055, %v1049
    %v1446 = vpack.c.b16 %v1056, %v1050
    %v1447 = vpack.c.b16 %v1057, %v1051
    %v1448 = vpack.c.b16 %v1058, %v1052
    %v1449 = vpack.c.b16 %v1059, %v1053
    %v1450 = vpack.c.b16 %v1066, %v1060
    %v1451 = vpack.c.b16 %v1067, %v1061
    %v1452 = vpack.c.b16 %v1068, %v1062
    %v1453 = vpack.c.b16 %v1069, %v1063
    %v1454 = vpack.c.b16 %v1070, %v1064
    %v1455 = vpack.c.b16 %v1071, %v1065
    %v1456 = vpack.c.b16 %v1078, %v1072
    %v1457 = vpack.c.b16 %v1079, %v1073
    %v1458 = vpack.c.b16 %v1080, %v1074
    %v1459 = vpack.c.b16 %v1081, %v1075
    %v1460 = vpack.c.b16 %v1082, %v1076
    %v1461 = vpack.c.b16 %v1083, %v1077
    %v1462 = vpack.c.b16 %v1090, %v1084
    %v1463 = vpack.c.b16 %v1091, %v1085
    %v1464 = vpack.c.b16 %v1092, %v1086
    %v1465 = vpack.c.b16 %v1093, %v1087
    %v1466 = vpack.c.b16 %v1094, %v1088
    %v1467 = vpack.c.b16 %v1095, %v1089
    %v1468 = vpack.c.b16 %v1102, %v1096
    %v1469 = vpack.c.b16 %v1103, %v1097
    %v1470 = vpack.c.b16 %v1104, %v1098
    %v1471 = vpack.c.b16 %v1105, %v1099
    %v1472 = vpack.c.b16 %v1106, %v1100
    %v1473 = vpack.c.b16 %v1107, %v1101
    %v1474 = vpack.c.b16 %v1114, %v1108
    %v1475 = vpack.c.b16 %v1115, %v1109
    %v1476 = vpack.c.b16 %v1116, %v1110
    %v1477 = vpack.c.b16 %v1117, %v1111
    %v1478 = vpack.c.b16 %v1118, %v1112
    %v1479 = vpack.c.b16 %v1119, %v1113
    %v1480 = vpack.c.b16 %v1126, %v1120
    %v1481 = vpack.c.b16 %v1127, %v1121
    %v1482 = vpack.c.b16 %v1128, %v1122
    %v1483 = vpack.c.b16 %v1129, %v1123
    %v1484 = vpack.c.b16 %v1130, %v1124
    %v1485 = vpack.c.b16 %v1131, %v1125
    %v1486 = vpack.c.b16 %v1138, %v1132
    %v1487 = vpack.c.b16 %v1139, %v1133
    %v1488 = vpack.c.b16 %v1140, %v1134
    %v1489 = vpack.c.b16 %v1141, %v1135
    %v1490 = vpack.c.b16 %v1142, %v1136
    %v1491 = vpack.c.b16 %v1143, %v1137
    %v1492 = vpack.c.b16 %v1150, %v1144
    %v1493 = vpack.c.b16 %v1151, %v1145
    %v1494 = vpack.c.b16 %v1152, %v1146
    %v1495 = vpack.c.b16 %v1153, %v1147
    %v1496 = vpack.c.b16 %v1154, %v1148
    %v1497 = vpack.c.b16 %v1155, %v1149
    %v1498 = vpack.c.b16 %v1162, %v1156
    %v1499 = vpack.c.b16 %v1163, %v1157
    %v1500 = vpack.c.b16 %v1164, %v1158
    %v1501 = vpack.c.b16 %v1165, %v1159
    %v1502 = vpack.c.b16 %v1166, %v1160
    %v1503 = vpack.c.b16 %v1167, %v1161
    %v1504 = vpack.c.b16 %v1174, %v1168
    %v1505 = vpack.c.b16 %v1175, %v1169
    %v1506 = vpack.c.b16 %v1176, %v1170
    %v1507 = vpack.c.b16 %v1177, %v1171
    %v1508 = vpack.c.b16 %v1178, %v1172
    %v1509 = vpack.c.b16 %v1179, %v1173
    %v1510 = vpack.c.b16 %v1186, %v1180
    %v1511 = vpack.c.b16 %v1187, %v1181
    %v1512 = vpack.c.b16 %v1188, %v1182
    %v1513 = vpack.c.b16 %v1189, %v1183
    %v1514 = vpack.c.b16 %v1190, %v1184
    %v1515 = vpack.c.b16 %v1191, %v1185
    %v1516 = vpack.c.b16 %v1198, %v1192
    %v1517 = vpack.c.b16 %v1199, %v1193
    %v1518 = vpack.c.b16 %v1200, %v1194
    %v1519 = vpack.c.b16 %v1201, %v1195
    %v1520 = vpack.c.b16 %v1202, %v1196
    %v1521 = vpack.c.b16 %v1203, %v1197
    %v1522 = vpack.c.b16 %v1210, %v1204
    %v1523 = vpack.c.b16 %v1211, %v1205
    %v1524 = vpack.c.b16 %v1212, %v1206
    %v1525 = vpack.c.b16 %v1213, %v1207
    %v1526 = vpack.c.b16 %v1214, %v1208
    %v1527 = vpack.c.b16 %v1215, %v1209
    %v1528 = vpack.c.b16 %v1222, %v1216
    %v1529 = vpack.c.b16 %v1223, %v1217
    %v1530 = vpack.c.b16 %v1224, %v1218
    %v1531 = vpack.c.b16 %v1225, %v1219
    %v1532 = vpack.c.b16 %v1226, %v1220
    %v1533 = vpack.c.b16 %v1227, %v1221
    %v1534 = vpack.c.b16 %v1234, %v1228
    %v1535 = vpack.c.b16 %v1235, %v1229
    %v1536 = vpack.c.b16 %v1236, %v1230
    %v1537 = vpack.c.b16 %v1237, %v1231
    %v1538 = vpack.c.b16 %v1238, %v1232
    %v1539 = vpack.c.b16 %v1239, %v1233
    %v1540 = vpack.c.b16 %v1246, %v1240
    %v1541 = vpack.c.b16 %v1247, %v1241
    %v1542 = vpack.c.b16 %v1248, %v1242
    %v1543 = vpack.c.b16 %v1249, %v1243
    %v1544 = vpack.c.b16 %v1250, %v1244
    %v1545 = vpack.c.b16 %v1251, %v1245
    %v1546 = vpack.c.b16 %v1258, %v1252
    %v1547 = vpack.c.b16 %v1259, %v1253
    %v1548 = vpack.c.b16 %v1260, %v1254
    %v1549 = vpack.c.b16 %v1261, %v1255
    %v1550 = vpack.c.b16 %v1262, %v1256
    %v1551 = vpack.c.b16 %v1263, %v1257
    %1840 = vmatpush.bf16.msra.mxu0 %v1306
    %1841 = vmatpush.bf16.msra.mxu0 %v1300
    %1842 = vmatpush.bf16.msra.mxu0 %v1294
    %1843 = vmatpush.bf16.msra.mxu0 %v1288
    %1844 = vmatpush.bf16.msra.mxu0 %v1282
    %1845 = vmatpush.bf16.msra.mxu0 %v1276
    %1846 = vmatpush.bf16.msra.mxu0 %v1270
    %1847 = vmatpush.bf16.msra.mxu0 %v1264
    %1848 = vmatmul.bf16.gmra.mxu0 %v92
    %v1849 = vpop.f32.mrf.mxu0
    %v1850 = vadd.f32 %v388, %v1849
    %v1851 = vpop.f32.mrf.mxu0
    %v1852 = vadd.f32 %v388, %v1851
    %1853 = vdwg.mxu0
    %1854 = vmatpush.bf16.msra.mxu0 %v1354
    %1855 = vmatpush.bf16.msra.mxu0 %v1348
    %1856 = vmatpush.bf16.msra.mxu0 %v1342
    %1857 = vmatpush.bf16.msra.mxu0 %v1336
    %1858 = vmatpush.bf16.msra.mxu0 %v1330
    %1859 = vmatpush.bf16.msra.mxu0 %v1324
    %1860 = vmatpush.bf16.msra.mxu0 %v1318
    %1861 = vmatpush.bf16.msra.mxu0 %v1312
    %1862 = vmatmul.bf16.gmra.mxu0 %v93
    %v1863 = vpop.f32.mrf.mxu0
    %v1864 = vadd.f32 %v1850, %v1863
    %v1865 = vpop.f32.mrf.mxu0
    %v1866 = vadd.f32 %v1852, %v1865
    %1867 = vdwg.mxu0
    %1868 = vmatpush.bf16.msra.mxu0 %v1402
    %1869 = vmatpush.bf16.msra.mxu0 %v1396
    %1870 = vmatpush.bf16.msra.mxu0 %v1390
    %1871 = vmatpush.bf16.msra.mxu0 %v1384
    %1872 = vmatpush.bf16.msra.mxu0 %v1378
    %1873 = vmatpush.bf16.msra.mxu0 %v1372
    %1874 = vmatpush.bf16.msra.mxu0 %v1366
    %1875 = vmatpush.bf16.msra.mxu0 %v1360
    %1876 = vmatmul.bf16.gmra.mxu0 %v94
    %v1877 = vpop.f32.mrf.mxu0
    %v1878 = vadd.f32 %v1864, %v1877
    %v1879 = vpop.f32.mrf.mxu0
    %v1880 = vadd.f32 %v1866, %v1879
    %1881 = vdwg.mxu0
    %1882 = vmatpush.bf16.msra.mxu0 %v1450
    %1883 = vmatpush.bf16.msra.mxu0 %v1444
    %1884 = vmatpush.bf16.msra.mxu0 %v1438
    %1885 = vmatpush.bf16.msra.mxu0 %v1432
    %1886 = vmatpush.bf16.msra.mxu0 %v1426
    %1887 = vmatpush.bf16.msra.mxu0 %v1420
    %1888 = vmatpush.bf16.msra.mxu0 %v1414
    %1889 = vmatpush.bf16.msra.mxu0 %v1408
    %1890 = vmatmul.bf16.gmra.mxu0 %v95
    %v1891 = vpop.f32.mrf.mxu0
    %v1892 = vadd.f32 %v1878, %v1891
    %v1893 = vpop.f32.mrf.mxu0
    %v1894 = vadd.f32 %v1880, %v1893
    %1895 = vdwg.mxu0
    %1896 = vmatpush.bf16.msra.mxu0 %v1498
    %1897 = vmatpush.bf16.msra.mxu0 %v1492
    %1898 = vmatpush.bf16.msra.mxu0 %v1486
    %1899 = vmatpush.bf16.msra.mxu0 %v1480
    %1900 = vmatpush.bf16.msra.mxu0 %v1474
    %1901 = vmatpush.bf16.msra.mxu0 %v1468
    %1902 = vmatpush.bf16.msra.mxu0 %v1462
    %1903 = vmatpush.bf16.msra.mxu0 %v1456
    %1904 = vmatmul.bf16.gmra.mxu0 %v96
    %v1905 = vpop.f32.mrf.mxu0
    %v1906 = vadd.f32 %v1892, %v1905
    %v1907 = vpop.f32.mrf.mxu0
    %v1908 = vadd.f32 %v1894, %v1907
    %1909 = vdwg.mxu0
    %1910 = vmatpush.bf16.msra.mxu0 %v1546
    %1911 = vmatpush.bf16.msra.mxu0 %v1540
    %1912 = vmatpush.bf16.msra.mxu0 %v1534
    %1913 = vmatpush.bf16.msra.mxu0 %v1528
    %1914 = vmatpush.bf16.msra.mxu0 %v1522
    %1915 = vmatpush.bf16.msra.mxu0 %v1516
    %1916 = vmatpush.bf16.msra.mxu0 %v1510
    %1917 = vmatpush.bf16.msra.mxu0 %v1504
    %1918 = vmatmul.bf16.gmra.mxu0 %v97
    %v1919 = vpop.f32.mrf.mxu0
    %v1920 = vadd.f32 %v1906, %v1919
    %v1921 = vpop.f32.mrf.mxu0
    %v1922 = vadd.f32 %v1908, %v1921
    %1923 = vdwg.mxu0
    %1924 = vmatpush.bf16.msra.mxu0 %v1307
    %1925 = vmatpush.bf16.msra.mxu0 %v1301
    %1926 = vmatpush.bf16.msra.mxu0 %v1295
    %1927 = vmatpush.bf16.msra.mxu0 %v1289
    %1928 = vmatpush.bf16.msra.mxu0 %v1283
    %1929 = vmatpush.bf16.msra.mxu0 %v1277
    %1930 = vmatpush.bf16.msra.mxu0 %v1271
    %1931 = vmatpush.bf16.msra.mxu0 %v1265
    %1932 = vmatmul.bf16.gmra.mxu0 %v92
    %v1933 = vpop.f32.mrf.mxu0
    %v1934 = vadd.f32 %v389, %v1933
    %v1935 = vpop.f32.mrf.mxu0
    %v1936 = vadd.f32 %v389, %v1935
    %1937 = vdwg.mxu0
    %1938 = vmatpush.bf16.msra.mxu0 %v1355
    %1939 = vmatpush.bf16.msra.mxu0 %v1349
    %1940 = vmatpush.bf16.msra.mxu0 %v1343
    %1941 = vmatpush.bf16.msra.mxu0 %v1337
    %1942 = vmatpush.bf16.msra.mxu0 %v1331
    %1943 = vmatpush.bf16.msra.mxu0 %v1325
    %1944 = vmatpush.bf16.msra.mxu0 %v1319
    %1945 = vmatpush.bf16.msra.mxu0 %v1313
    %1946 = vmatmul.bf16.gmra.mxu0 %v93
    %v1947 = vpop.f32.mrf.mxu0
    %v1948 = vadd.f32 %v1934, %v1947
    %v1949 = vpop.f32.mrf.mxu0
    %v1950 = vadd.f32 %v1936, %v1949
    %1951 = vdwg.mxu0
    %1952 = vmatpush.bf16.msra.mxu0 %v1403
    %1953 = vmatpush.bf16.msra.mxu0 %v1397
    %1954 = vmatpush.bf16.msra.mxu0 %v1391
    %1955 = vmatpush.bf16.msra.mxu0 %v1385
    %1956 = vmatpush.bf16.msra.mxu0 %v1379
    %1957 = vmatpush.bf16.msra.mxu0 %v1373
    %1958 = vmatpush.bf16.msra.mxu0 %v1367
    %1959 = vmatpush.bf16.msra.mxu0 %v1361
    %1960 = vmatmul.bf16.gmra.mxu0 %v94
    %v1961 = vpop.f32.mrf.mxu0
    %v1962 = vadd.f32 %v1948, %v1961
    %v1963 = vpop.f32.mrf.mxu0
    %v1964 = vadd.f32 %v1950, %v1963
    %1965 = vdwg.mxu0
    %1966 = vmatpush.bf16.msra.mxu0 %v1451
    %1967 = vmatpush.bf16.msra.mxu0 %v1445
    %1968 = vmatpush.bf16.msra.mxu0 %v1439
    %1969 = vmatpush.bf16.msra.mxu0 %v1433
    %1970 = vmatpush.bf16.msra.mxu0 %v1427
    %1971 = vmatpush.bf16.msra.mxu0 %v1421
    %1972 = vmatpush.bf16.msra.mxu0 %v1415
    %1973 = vmatpush.bf16.msra.mxu0 %v1409
    %1974 = vmatmul.bf16.gmra.mxu0 %v95
    %v1975 = vpop.f32.mrf.mxu0
    %v1976 = vadd.f32 %v1962, %v1975
    %v1977 = vpop.f32.mrf.mxu0
    %v1978 = vadd.f32 %v1964, %v1977
    %1979 = vdwg.mxu0
    %1980 = vmatpush.bf16.msra.mxu0 %v1499
    %1981 = vmatpush.bf16.msra.mxu0 %v1493
    %1982 = vmatpush.bf16.msra.mxu0 %v1487
    %1983 = vmatpush.bf16.msra.mxu0 %v1481
    %1984 = vmatpush.bf16.msra.mxu0 %v1475
    %1985 = vmatpush.bf16.msra.mxu0 %v1469
    %1986 = vmatpush.bf16.msra.mxu0 %v1463
    %1987 = vmatpush.bf16.msra.mxu0 %v1457
    %1988 = vmatmul.bf16.gmra.mxu0 %v96
    %v1989 = vpop.f32.mrf.mxu0
    %v1990 = vadd.f32 %v1976, %v1989
    %v1991 = vpop.f32.mrf.mxu0
    %v1992 = vadd.f32 %v1978, %v1991
    %1993 = vdwg.mxu0
    %1994 = vmatpush.bf16.msra.mxu0 %v1547
    %1995 = vmatpush.bf16.msra.mxu0 %v1541
    %1996 = vmatpush.bf16.msra.mxu0 %v1535
    %1997 = vmatpush.bf16.msra.mxu0 %v1529
    %1998 = vmatpush.bf16.msra.mxu0 %v1523
    %1999 = vmatpush.bf16.msra.mxu0 %v1517
    %2000 = vmatpush.bf16.msra.mxu0 %v1511
    %2001 = vmatpush.bf16.msra.mxu0 %v1505
    %2002 = vmatmul.bf16.gmra.mxu0 %v97
    %v2003 = vpop.f32.mrf.mxu0
    %v2004 = vadd.f32 %v1990, %v2003
    %v2005 = vpop.f32.mrf.mxu0
    %v2006 = vadd.f32 %v1992, %v2005
    %2007 = vdwg.mxu0
    %2008 = vmatpush.bf16.msra.mxu0 %v1308
    %2009 = vmatpush.bf16.msra.mxu0 %v1302
    %2010 = vmatpush.bf16.msra.mxu0 %v1296
    %2011 = vmatpush.bf16.msra.mxu0 %v1290
    %2012 = vmatpush.bf16.msra.mxu0 %v1284
    %2013 = vmatpush.bf16.msra.mxu0 %v1278
    %2014 = vmatpush.bf16.msra.mxu0 %v1272
    %2015 = vmatpush.bf16.msra.mxu0 %v1266
    %2016 = vmatmul.bf16.gmra.mxu0 %v92
    %v2017 = vpop.f32.mrf.mxu0
    %v2018 = vadd.f32 %v390, %v2017
    %v2019 = vpop.f32.mrf.mxu0
    %v2020 = vadd.f32 %v390, %v2019
    %2021 = vdwg.mxu0
    %2022 = vmatpush.bf16.msra.mxu0 %v1356
    %2023 = vmatpush.bf16.msra.mxu0 %v1350
    %2024 = vmatpush.bf16.msra.mxu0 %v1344
    %2025 = vmatpush.bf16.msra.mxu0 %v1338
    %2026 = vmatpush.bf16.msra.mxu0 %v1332
    %2027 = vmatpush.bf16.msra.mxu0 %v1326
    %2028 = vmatpush.bf16.msra.mxu0 %v1320
    %2029 = vmatpush.bf16.msra.mxu0 %v1314
    %2030 = vmatmul.bf16.gmra.mxu0 %v93
    %v2031 = vpop.f32.mrf.mxu0
    %v2032 = vadd.f32 %v2018, %v2031
    %v2033 = vpop.f32.mrf.mxu0
    %v2034 = vadd.f32 %v2020, %v2033
    %2035 = vdwg.mxu0
    %2036 = vmatpush.bf16.msra.mxu0 %v1404
    %2037 = vmatpush.bf16.msra.mxu0 %v1398
    %2038 = vmatpush.bf16.msra.mxu0 %v1392
    %2039 = vmatpush.bf16.msra.mxu0 %v1386
    %2040 = vmatpush.bf16.msra.mxu0 %v1380
    %2041 = vmatpush.bf16.msra.mxu0 %v1374
    %2042 = vmatpush.bf16.msra.mxu0 %v1368
    %2043 = vmatpush.bf16.msra.mxu0 %v1362
    %2044 = vmatmul.bf16.gmra.mxu0 %v94
    %v2045 = vpop.f32.mrf.mxu0
    %v2046 = vadd.f32 %v2032, %v2045
    %v2047 = vpop.f32.mrf.mxu0
    %v2048 = vadd.f32 %v2034, %v2047
    %2049 = vdwg.mxu0
    %2050 = vmatpush.bf16.msra.mxu0 %v1452
    %2051 = vmatpush.bf16.msra.mxu0 %v1446
    %2052 = vmatpush.bf16.msra.mxu0 %v1440
    %2053 = vmatpush.bf16.msra.mxu0 %v1434
    %2054 = vmatpush.bf16.msra.mxu0 %v1428
    %2055 = vmatpush.bf16.msra.mxu0 %v1422
    %2056 = vmatpush.bf16.msra.mxu0 %v1416
    %2057 = vmatpush.bf16.msra.mxu0 %v1410
    %2058 = vmatmul.bf16.gmra.mxu0 %v95
    %v2059 = vpop.f32.mrf.mxu0
    %v2060 = vadd.f32 %v2046, %v2059
    %v2061 = vpop.f32.mrf.mxu0
    %v2062 = vadd.f32 %v2048, %v2061
    %2063 = vdwg.mxu0
    %2064 = vmatpush.bf16.msra.mxu0 %v1500
    %2065 = vmatpush.bf16.msra.mxu0 %v1494
    %2066 = vmatpush.bf16.msra.mxu0 %v1488
    %2067 = vmatpush.bf16.msra.mxu0 %v1482
    %2068 = vmatpush.bf16.msra.mxu0 %v1476
    %2069 = vmatpush.bf16.msra.mxu0 %v1470
    %2070 = vmatpush.bf16.msra.mxu0 %v1464
    %2071 = vmatpush.bf16.msra.mxu0 %v1458
    %2072 = vmatmul.bf16.gmra.mxu0 %v96
    %v2073 = vpop.f32.mrf.mxu0
    %v2074 = vadd.f32 %v2060, %v2073
    %v2075 = vpop.f32.mrf.mxu0
    %v2076 = vadd.f32 %v2062, %v2075
    %2077 = vdwg.mxu0
    %2078 = vmatpush.bf16.msra.mxu0 %v1548
    %2079 = vmatpush.bf16.msra.mxu0 %v1542
    %2080 = vmatpush.bf16.msra.mxu0 %v1536
    %2081 = vmatpush.bf16.msra.mxu0 %v1530
    %2082 = vmatpush.bf16.msra.mxu0 %v1524
    %2083 = vmatpush.bf16.msra.mxu0 %v1518
    %2084 = vmatpush.bf16.msra.mxu0 %v1512
    %2085 = vmatpush.bf16.msra.mxu0 %v1506
    %2086 = vmatmul.bf16.gmra.mxu0 %v97
    %v2087 = vpop.f32.mrf.mxu0
    %v2088 = vadd.f32 %v2074, %v2087
    %v2089 = vpop.f32.mrf.mxu0
    %v2090 = vadd.f32 %v2076, %v2089
    %2091 = vdwg.mxu0
    %2092 = vmatpush.bf16.msra.mxu0 %v1309
    %2093 = vmatpush.bf16.msra.mxu0 %v1303
    %2094 = vmatpush.bf16.msra.mxu0 %v1297
    %2095 = vmatpush.bf16.msra.mxu0 %v1291
    %2096 = vmatpush.bf16.msra.mxu0 %v1285
    %2097 = vmatpush.bf16.msra.mxu0 %v1279
    %2098 = vmatpush.bf16.msra.mxu0 %v1273
    %2099 = vmatpush.bf16.msra.mxu0 %v1267
    %2100 = vmatmul.bf16.gmra.mxu0 %v92
    %v2101 = vpop.f32.mrf.mxu0
    %v2102 = vadd.f32 %v391, %v2101
    %v2103 = vpop.f32.mrf.mxu0
    %v2104 = vadd.f32 %v391, %v2103
    %2105 = vdwg.mxu0
    %2106 = vmatpush.bf16.msra.mxu0 %v1357
    %2107 = vmatpush.bf16.msra.mxu0 %v1351
    %2108 = vmatpush.bf16.msra.mxu0 %v1345
    %2109 = vmatpush.bf16.msra.mxu0 %v1339
    %2110 = vmatpush.bf16.msra.mxu0 %v1333
    %2111 = vmatpush.bf16.msra.mxu0 %v1327
    %2112 = vmatpush.bf16.msra.mxu0 %v1321
    %2113 = vmatpush.bf16.msra.mxu0 %v1315
    %2114 = vmatmul.bf16.gmra.mxu0 %v93
    %v2115 = vpop.f32.mrf.mxu0
    %v2116 = vadd.f32 %v2102, %v2115
    %v2117 = vpop.f32.mrf.mxu0
    %v2118 = vadd.f32 %v2104, %v2117
    %2119 = vdwg.mxu0
    %2120 = vmatpush.bf16.msra.mxu0 %v1405
    %2121 = vmatpush.bf16.msra.mxu0 %v1399
    %2122 = vmatpush.bf16.msra.mxu0 %v1393
    %2123 = vmatpush.bf16.msra.mxu0 %v1387
    %2124 = vmatpush.bf16.msra.mxu0 %v1381
    %2125 = vmatpush.bf16.msra.mxu0 %v1375
    %2126 = vmatpush.bf16.msra.mxu0 %v1369
    %2127 = vmatpush.bf16.msra.mxu0 %v1363
    %2128 = vmatmul.bf16.gmra.mxu0 %v94
    %v2129 = vpop.f32.mrf.mxu0
    %v2130 = vadd.f32 %v2116, %v2129
    %v2131 = vpop.f32.mrf.mxu0
    %v2132 = vadd.f32 %v2118, %v2131
    %2133 = vdwg.mxu0
    %2134 = vmatpush.bf16.msra.mxu0 %v1453
    %2135 = vmatpush.bf16.msra.mxu0 %v1447
    %2136 = vmatpush.bf16.msra.mxu0 %v1441
    %2137 = vmatpush.bf16.msra.mxu0 %v1435
    %2138 = vmatpush.bf16.msra.mxu0 %v1429
    %2139 = vmatpush.bf16.msra.mxu0 %v1423
    %2140 = vmatpush.bf16.msra.mxu0 %v1417
    %2141 = vmatpush.bf16.msra.mxu0 %v1411
    %2142 = vmatmul.bf16.gmra.mxu0 %v95
    %v2143 = vpop.f32.mrf.mxu0
    %v2144 = vadd.f32 %v2130, %v2143
    %v2145 = vpop.f32.mrf.mxu0
    %v2146 = vadd.f32 %v2132, %v2145
    %2147 = vdwg.mxu0
    %2148 = vmatpush.bf16.msra.mxu0 %v1501
    %2149 = vmatpush.bf16.msra.mxu0 %v1495
    %2150 = vmatpush.bf16.msra.mxu0 %v1489
    %2151 = vmatpush.bf16.msra.mxu0 %v1483
    %2152 = vmatpush.bf16.msra.mxu0 %v1477
    %2153 = vmatpush.bf16.msra.mxu0 %v1471
    %2154 = vmatpush.bf16.msra.mxu0 %v1465
    %2155 = vmatpush.bf16.msra.mxu0 %v1459
    %2156 = vmatmul.bf16.gmra.mxu0 %v96
    %v2157 = vpop.f32.mrf.mxu0
    %v2158 = vadd.f32 %v2144, %v2157
    %v2159 = vpop.f32.mrf.mxu0
    %v2160 = vadd.f32 %v2146, %v2159
    %2161 = vdwg.mxu0
    %2162 = vmatpush.bf16.msra.mxu0 %v1549
    %2163 = vmatpush.bf16.msra.mxu0 %v1543
    %2164 = vmatpush.bf16.msra.mxu0 %v1537
    %2165 = vmatpush.bf16.msra.mxu0 %v1531
    %2166 = vmatpush.bf16.msra.mxu0 %v1525
    %2167 = vmatpush.bf16.msra.mxu0 %v1519
    %2168 = vmatpush.bf16.msra.mxu0 %v1513
    %2169 = vmatpush.bf16.msra.mxu0 %v1507
    %2170 = vmatmul.bf16.gmra.mxu0 %v97
    %v2171 = vpop.f32.mrf.mxu0
    %v2172 = vadd.f32 %v2158, %v2171
    %v2173 = vpop.f32.mrf.mxu0
    %v2174 = vadd.f32 %v2160, %v2173
    %2175 = vdwg.mxu0
    %2176 = vmatpush.bf16.msra.mxu0 %v1310
    %2177 = vmatpush.bf16.msra.mxu0 %v1304
    %2178 = vmatpush.bf16.msra.mxu0 %v1298
    %2179 = vmatpush.bf16.msra.mxu0 %v1292
    %2180 = vmatpush.bf16.msra.mxu0 %v1286
    %2181 = vmatpush.bf16.msra.mxu0 %v1280
    %2182 = vmatpush.bf16.msra.mxu0 %v1274
    %2183 = vmatpush.bf16.msra.mxu0 %v1268
    %2184 = vmatmul.bf16.gmra.mxu0 %v92
    %v2185 = vpop.f32.mrf.mxu0
    %v2186 = vadd.f32 %v392, %v2185
    %v2187 = vpop.f32.mrf.mxu0
    %v2188 = vadd.f32 %v392, %v2187
    %2189 = vdwg.mxu0
    %2190 = vmatpush.bf16.msra.mxu0 %v1358
    %2191 = vmatpush.bf16.msra.mxu0 %v1352
    %2192 = vmatpush.bf16.msra.mxu0 %v1346
    %2193 = vmatpush.bf16.msra.mxu0 %v1340
    %2194 = vmatpush.bf16.msra.mxu0 %v1334
    %2195 = vmatpush.bf16.msra.mxu0 %v1328
    %2196 = vmatpush.bf16.msra.mxu0 %v1322
    %2197 = vmatpush.bf16.msra.mxu0 %v1316
    %2198 = vmatmul.bf16.gmra.mxu0 %v93
    %v2199 = vpop.f32.mrf.mxu0
    %v2200 = vadd.f32 %v2186, %v2199
    %v2201 = vpop.f32.mrf.mxu0
    %v2202 = vadd.f32 %v2188, %v2201
    %2203 = vdwg.mxu0
    %2204 = vmatpush.bf16.msra.mxu0 %v1406
    %2205 = vmatpush.bf16.msra.mxu0 %v1400
    %2206 = vmatpush.bf16.msra.mxu0 %v1394
    %2207 = vmatpush.bf16.msra.mxu0 %v1388
    %2208 = vmatpush.bf16.msra.mxu0 %v1382
    %2209 = vmatpush.bf16.msra.mxu0 %v1376
    %2210 = vmatpush.bf16.msra.mxu0 %v1370
    %2211 = vmatpush.bf16.msra.mxu0 %v1364
    %2212 = vmatmul.bf16.gmra.mxu0 %v94
    %v2213 = vpop.f32.mrf.mxu0
    %v2214 = vadd.f32 %v2200, %v2213
    %v2215 = vpop.f32.mrf.mxu0
    %v2216 = vadd.f32 %v2202, %v2215
    %2217 = vdwg.mxu0
    %2218 = vmatpush.bf16.msra.mxu0 %v1454
    %2219 = vmatpush.bf16.msra.mxu0 %v1448
    %2220 = vmatpush.bf16.msra.mxu0 %v1442
    %2221 = vmatpush.bf16.msra.mxu0 %v1436
    %2222 = vmatpush.bf16.msra.mxu0 %v1430
    %2223 = vmatpush.bf16.msra.mxu0 %v1424
    %2224 = vmatpush.bf16.msra.mxu0 %v1418
    %2225 = vmatpush.bf16.msra.mxu0 %v1412
    %2226 = vmatmul.bf16.gmra.mxu0 %v95
    %v2227 = vpop.f32.mrf.mxu0
    %v2228 = vadd.f32 %v2214, %v2227
    %v2229 = vpop.f32.mrf.mxu0
    %v2230 = vadd.f32 %v2216, %v2229
    %2231 = vdwg.mxu0
    %2232 = vmatpush.bf16.msra.mxu0 %v1502
    %2233 = vmatpush.bf16.msra.mxu0 %v1496
    %2234 = vmatpush.bf16.msra.mxu0 %v1490
    %2235 = vmatpush.bf16.msra.mxu0 %v1484
    %2236 = vmatpush.bf16.msra.mxu0 %v1478
    %2237 = vmatpush.bf16.msra.mxu0 %v1472
    %2238 = vmatpush.bf16.msra.mxu0 %v1466
    %2239 = vmatpush.bf16.msra.mxu0 %v1460
    %2240 = vmatmul.bf16.gmra.mxu0 %v96
    %v2241 = vpop.f32.mrf.mxu0
    %v2242 = vadd.f32 %v2228, %v2241
    %v2243 = vpop.f32.mrf.mxu0
    %v2244 = vadd.f32 %v2230, %v2243
    %2245 = vdwg.mxu0
    %2246 = vmatpush.bf16.msra.mxu0 %v1550
    %2247 = vmatpush.bf16.msra.mxu0 %v1544
    %2248 = vmatpush.bf16.msra.mxu0 %v1538
    %2249 = vmatpush.bf16.msra.mxu0 %v1532
    %2250 = vmatpush.bf16.msra.mxu0 %v1526
    %2251 = vmatpush.bf16.msra.mxu0 %v1520
    %2252 = vmatpush.bf16.msra.mxu0 %v1514
    %2253 = vmatpush.bf16.msra.mxu0 %v1508
    %2254 = vmatmul.bf16.gmra.mxu0 %v97
    %v2255 = vpop.f32.mrf.mxu0
    %v2256 = vadd.f32 %v2242, %v2255
    %v2257 = vpop.f32.mrf.mxu0
    %v2258 = vadd.f32 %v2244, %v2257
    %2259 = vdwg.mxu0
    %2260 = vmatpush.bf16.msra.mxu0 %v1311
    %2261 = vmatpush.bf16.msra.mxu0 %v1305
    %2262 = vmatpush.bf16.msra.mxu0 %v1299
    %2263 = vmatpush.bf16.msra.mxu0 %v1293
    %2264 = vmatpush.bf16.msra.mxu0 %v1287
    %2265 = vmatpush.bf16.msra.mxu0 %v1281
    %2266 = vmatpush.bf16.msra.mxu0 %v1275
    %2267 = vmatpush.bf16.msra.mxu0 %v1269
    %2268 = vmatmul.bf16.gmra.mxu0 %v92
    %v2269 = vpop.f32.mrf.mxu0
    %v2270 = vadd.f32 %v393, %v2269
    %v2271 = vpop.f32.mrf.mxu0
    %v2272 = vadd.f32 %v393, %v2271
    %2273 = vdwg.mxu0
    %2274 = vmatpush.bf16.msra.mxu0 %v1359
    %2275 = vmatpush.bf16.msra.mxu0 %v1353
    %2276 = vmatpush.bf16.msra.mxu0 %v1347
    %2277 = vmatpush.bf16.msra.mxu0 %v1341
    %2278 = vmatpush.bf16.msra.mxu0 %v1335
    %2279 = vmatpush.bf16.msra.mxu0 %v1329
    %2280 = vmatpush.bf16.msra.mxu0 %v1323
    %2281 = vmatpush.bf16.msra.mxu0 %v1317
    %2282 = vmatmul.bf16.gmra.mxu0 %v93
    %v2283 = vpop.f32.mrf.mxu0
    %v2284 = vadd.f32 %v2270, %v2283
    %v2285 = vpop.f32.mrf.mxu0
    %v2286 = vadd.f32 %v2272, %v2285
    %2287 = vdwg.mxu0
    %2288 = vmatpush.bf16.msra.mxu0 %v1407
    %2289 = vmatpush.bf16.msra.mxu0 %v1401
    %2290 = vmatpush.bf16.msra.mxu0 %v1395
    %2291 = vmatpush.bf16.msra.mxu0 %v1389
    %2292 = vmatpush.bf16.msra.mxu0 %v1383
    %2293 = vmatpush.bf16.msra.mxu0 %v1377
    %2294 = vmatpush.bf16.msra.mxu0 %v1371
    %2295 = vmatpush.bf16.msra.mxu0 %v1365
    %2296 = vmatmul.bf16.gmra.mxu0 %v94
    %v2297 = vpop.f32.mrf.mxu0
    %v2298 = vadd.f32 %v2284, %v2297
    %v2299 = vpop.f32.mrf.mxu0
    %v2300 = vadd.f32 %v2286, %v2299
    %2301 = vdwg.mxu0
    %2302 = vmatpush.bf16.msra.mxu0 %v1455
    %2303 = vmatpush.bf16.msra.mxu0 %v1449
    %2304 = vmatpush.bf16.msra.mxu0 %v1443
    %2305 = vmatpush.bf16.msra.mxu0 %v1437
    %2306 = vmatpush.bf16.msra.mxu0 %v1431
    %2307 = vmatpush.bf16.msra.mxu0 %v1425
    %2308 = vmatpush.bf16.msra.mxu0 %v1419
    %2309 = vmatpush.bf16.msra.mxu0 %v1413
    %2310 = vmatmul.bf16.gmra.mxu0 %v95
    %v2311 = vpop.f32.mrf.mxu0
    %v2312 = vadd.f32 %v2298, %v2311
    %v2313 = vpop.f32.mrf.mxu0
    %v2314 = vadd.f32 %v2300, %v2313
    %2315 = vdwg.mxu0
    %2316 = vmatpush.bf16.msra.mxu0 %v1503
    %2317 = vmatpush.bf16.msra.mxu0 %v1497
    %2318 = vmatpush.bf16.msra.mxu0 %v1491
    %2319 = vmatpush.bf16.msra.mxu0 %v1485
    %2320 = vmatpush.bf16.msra.mxu0 %v1479
    %2321 = vmatpush.bf16.msra.mxu0 %v1473
    %2322 = vmatpush.bf16.msra.mxu0 %v1467
    %2323 = vmatpush.bf16.msra.mxu0 %v1461
    %2324 = vmatmul.bf16.gmra.mxu0 %v96
    %v2325 = vpop.f32.mrf.mxu0
    %v2326 = vadd.f32 %v2312, %v2325
    %v2327 = vpop.f32.mrf.mxu0
    %v2328 = vadd.f32 %v2314, %v2327
    %2329 = vdwg.mxu0
    %2330 = vmatpush.bf16.msra.mxu0 %v1551
    %2331 = vmatpush.bf16.msra.mxu0 %v1545
    %2332 = vmatpush.bf16.msra.mxu0 %v1539
    %2333 = vmatpush.bf16.msra.mxu0 %v1533
    %2334 = vmatpush.bf16.msra.mxu0 %v1527
    %2335 = vmatpush.bf16.msra.mxu0 %v1521
    %2336 = vmatpush.bf16.msra.mxu0 %v1515
    %2337 = vmatpush.bf16.msra.mxu0 %v1509
    %2338 = vmatmul.bf16.gmra.mxu0 %v97
    %v2339 = vpop.f32.mrf.mxu0
    %v2340 = vadd.f32 %v2326, %v2339
    %v2341 = vpop.f32.mrf.mxu0
    %v2342 = vadd.f32 %v2328, %v2341
    %2343 = vdwg.mxu0
    %v2344 = vpack.c.bf16 %v2004, %v1920
    %v2345 = vpack.c.bf16 %v2172, %v2088
    %v2346 = vpack.c.bf16 %v2340, %v2256
    %v2347 = vpack.c.bf16 %v2006, %v1922
    %v2348 = vpack.c.bf16 %v2174, %v2090
    %v2349 = vpack.c.bf16 %v2342, %v2258
    %v2350 = vunpack.c.l.bf16 %v2344
    %v2351 = vunpack.c.h.bf16 %v2344
    %v2352 = vunpack.c.l.bf16 %v2345
    %v2353 = vunpack.c.h.bf16 %v2345
    %v2354 = vunpack.c.l.bf16 %v2346
    %v2355 = vunpack.c.h.bf16 %v2346
    %v2356 = vunpack.c.l.bf16 %v2347
    %v2357 = vunpack.c.h.bf16 %v2347
    %v2358 = vunpack.c.l.bf16 %v2348
    %v2359 = vunpack.c.h.bf16 %v2348
    %v2360 = vunpack.c.l.bf16 %v2349
    %v2361 = vunpack.c.h.bf16 %v2349
    %v2362 = vtanh.pop %v2350
    %v2363 = vtanh.pop %v2351
    %v2364 = vtanh.pop %v2352
    %v2365 = vtanh.pop %v2353
    %v2366 = vtanh.pop %v2354
    %v2367 = vtanh.pop %v2355
    %v2368 = vtanh.pop %v2356
    %v2369 = vtanh.pop %v2357
    %v2370 = vtanh.pop %v2358
    %v2371 = vtanh.pop %v2359
    %v2372 = vtanh.pop %v2360
    %v2373 = vtanh.pop %v2361
    %v2374 = vpack.c.bf16 %v2363, %v2362
    %v2375 = vpack.c.bf16 %v2365, %v2364
    %v2376 = vpack.c.bf16 %v2367, %v2366
    %v2377 = vpack.c.bf16 %v2369, %v2368
    %v2378 = vpack.c.bf16 %v2371, %v2370
    %v2379 = vpack.c.bf16 %v2373, %v2372
    %v2380 = vld [vmem:[#allocation8] sm:$0x3f]
    %v2382 = vperm.slane %v2380, 0
    %v2383 = vperm.slane %v2380, 1
    %v2384 = vperm.slane %v2380, 2
    %v2385 = vperm.slane %v2380, 3
    %v2386 = vperm.slane %v2380, 4
    %v2387 = vperm.slane %v2380, 5
    %v2394 = vpack.c.bf16 %v2383, %v2382
    %v2395 = vpack.c.bf16 %v2385, %v2384
    %v2396 = vpack.c.bf16 %v2387, %v2386
    %v2400 = vunpack.c.l.b16 %v2394
    %v2401 = vunpack.c.h.b16 %v2394
    %v2402 = vunpack.c.l.b16 %v2395
    %v2403 = vunpack.c.h.b16 %v2395
    %v2404 = vunpack.c.l.b16 %v2396
    %v2405 = vunpack.c.h.b16 %v2396
    %v2406 = vpack.c.b16 %v2400, %v2400
    %v2407 = vpack.c.b16 %v2401, %v2401
    %v2408 = vpack.c.b16 %v2402, %v2402
    %v2409 = vpack.c.b16 %v2403, %v2403
    %v2410 = vpack.c.b16 %v2404, %v2404
    %v2411 = vpack.c.b16 %v2405, %v2405
    %v2413 = vpack.i.b16 %v2406, %v2406
    %v2415 = vperm.slane %v2413, 0
    %v2417 = vpack.i.b16 %v2407, %v2407
    %v2419 = vperm.slane %v2417, 0
    %v2421 = vpack.i.b16 %v2408, %v2408
    %v2423 = vperm.slane %v2421, 0
    %v2425 = vpack.i.b16 %v2409, %v2409
    %v2427 = vperm.slane %v2425, 0
    %v2429 = vpack.i.b16 %v2410, %v2410
    %v2431 = vperm.slane %v2429, 0
    %v2433 = vpack.i.b16 %v2411, %v2411
    %v2435 = vperm.slane %v2433, 0
    %v2436 = vunpack.c.l.bf16 %v2374
    %v2437 = vunpack.c.h.bf16 %v2374
    %v2438 = vunpack.c.l.bf16 %v2375
    %v2439 = vunpack.c.h.bf16 %v2375
    %v2440 = vunpack.c.l.bf16 %v2376
    %v2441 = vunpack.c.h.bf16 %v2376
    %v2442 = vunpack.c.l.bf16 %v2377
    %v2443 = vunpack.c.h.bf16 %v2377
    %v2444 = vunpack.c.l.bf16 %v2378
    %v2445 = vunpack.c.h.bf16 %v2378
    %v2446 = vunpack.c.l.bf16 %v2379
    %v2447 = vunpack.c.h.bf16 %v2379
    %v2448 = vunpack.c.l.bf16 %v2415
    %v2449 = vunpack.c.l.bf16 %v2419
    %v2450 = vunpack.c.l.bf16 %v2423
    %v2451 = vunpack.c.l.bf16 %v2427
    %v2452 = vunpack.c.l.bf16 %v2431
    %v2453 = vunpack.c.l.bf16 %v2435
    %v2454 = vmul.f32 %v2436, %v2448
    %v2455 = vmul.f32 %v2437, %v2449
    %v2456 = vmul.f32 %v2438, %v2450
    %v2457 = vmul.f32 %v2439, %v2451
    %v2458 = vmul.f32 %v2440, %v2452
    %v2459 = vmul.f32 %v2441, %v2453
    %v2460 = vmul.f32 %v2442, %v2448
    %v2461 = vmul.f32 %v2443, %v2449
    %v2462 = vmul.f32 %v2444, %v2450
    %v2463 = vmul.f32 %v2445, %v2451
    %v2464 = vmul.f32 %v2446, %v2452
    %v2465 = vmul.f32 %v2447, %v2453
    %v2466 = vpack.c.bf16 %v2460, %v2454
    %v2467 = vpack.c.bf16 %v2461, %v2455
    %v2468 = vpack.c.bf16 %v2462, %v2456
    %v2469 = vpack.c.bf16 %v2463, %v2457
    %v2470 = vpack.c.bf16 %v2464, %v2458
    %v2471 = vpack.c.bf16 %v2465, %v2459
    %v2472 = vunpack.c.l.bf16 %v2466
    %v2473 = vunpack.c.l.bf16 %v2467
    %v2474 = vunpack.c.l.bf16 %v2468
    %v2475 = vunpack.c.l.bf16 %v2469
    %v2476 = vunpack.c.l.bf16 %v2470
    %v2477 = vunpack.c.l.bf16 %v2471
    %v2478 = vunpack.c.h.bf16 %v2466
    %v2479 = vunpack.c.h.bf16 %v2467
    %v2480 = vunpack.c.h.bf16 %v2468
    %v2481 = vunpack.c.h.bf16 %v2469
    %v2482 = vunpack.c.h.bf16 %v2470
    %v2483 = vunpack.c.h.bf16 %v2471
    %v2484 = vadd.f32 %v2472, %v2473
    %v2485 = vadd.f32 %v2484, %v2474
    %v2486 = vadd.f32 %v2485, %v2475
    %v2487 = vadd.f32 %v2486, %v2476
    %v2488 = vadd.f32 %v2487, %v2477
    %2489 = vadd.xlane.f32.xlu0 %v2488
    %v2490 = vpop.xlane.xlu0 %2489
    %v2491 = vadd.f32 %v2478, %v2479
    %v2492 = vadd.f32 %v2491, %v2480
    %v2493 = vadd.f32 %v2492, %v2481
    %v2494 = vadd.f32 %v2493, %v2482
    %v2495 = vadd.f32 %v2494, %v2483
    %2496 = vadd.xlane.f32.xlu0 %v2495
    %v2497 = vpop.xlane.xlu0 %2496
    %s2498 = sld [smem:[#allocation2]]
    %v2499 = vstv %s2498
    %v2500 = vadd.f32 %v2490, %v2499
    %v2501 = vadd.f32 %v2497, %v2499
    %v2502 = vxor.u32 %v2500, 2147483648
    %v2503 = vxor.u32 %v2501, 2147483648
    %v2504 = vmul.f32 %v2502, 1.442695
    %v2505 = vpow.pop %v2504
    %v2506 = vmul.f32 %v2503, 1.442695
    %v2507 = vpow.pop %v2506
    %v2508 = vadd.f32 %v2505, 1.0
    %v2509 = vadd.f32 %v2507, 1.0
    %v2510 = vrcp.pop %v2508
    %v2511 = vmul.f32 %v2508, %v2510
    %v2512 = vsub.f32 1.0, %v2511
    %v2513 = vmul.f32 %v2510, %v2512
    %v2514 = vadd.f32 %v2510, %v2513
    %vm2515 = vweird.f32 %v2508
    %vm2516 = vweird.f32 %v2510
    %vm2517 = vmor %vm2515, %vm2516
    %v2518 = vsel %vm2517, %v2510, %v2514
    %v2519 = vand.u32 2147483647, %v2508
    %vm2520 = vcmp.eq.f32.partialorder %v2519, 8.507059e+37
    %v2521 = vand.u32 %v2508, 2147483648
    %v2522 = vor.u32 1.1754944e-38, %v2521
    %v2523 = vsel %vm2520, %v2522, %v2518
    %v2524 = vmul.f32 1.0, %v2523
    %v2525 = vrcp.pop %v2509
    %v2526 = vmul.f32 %v2509, %v2525
    %v2527 = vsub.f32 1.0, %v2526
    %v2528 = vmul.f32 %v2525, %v2527
    %v2529 = vadd.f32 %v2525, %v2528
    %vm2530 = vweird.f32 %v2509
    %vm2531 = vweird.f32 %v2525
    %vm2532 = vmor %vm2530, %vm2531
    %v2533 = vsel %vm2532, %v2525, %v2529
    %v2534 = vand.u32 2147483647, %v2509
    %vm2535 = vcmp.eq.f32.partialorder %v2534, 8.507059e+37
    %v2536 = vand.u32 %v2509, 2147483648
    %v2537 = vor.u32 1.1754944e-38, %v2536
    %v2538 = vsel %vm2535, %v2537, %v2533
    %v2539 = vmul.f32 1.0, %v2538
    %vm2540 = vcmask 7168
    %2541 = vst.msk [vmem:[%s5] sm:$0xff] %vm2540, %v2524
    %2542 = vst.msk [vmem:[%s5 + $0x8] sm:$0xff] %vm2540, %v2539
    // Predicated region
    $region38: #{tpu_custom_call.1} parent=1 // pred_check
      _
    $region39: #{tpu_custom_call.1} parent=1 // pred_check_branch
      %2544 = sbr.rel (0) target = $region41
    $region40: #{tpu_custom_call.1} parent=1 // pred_region
      _
    $region41: #{tpu_custom_call.1} parent=1 // pred_fallthru
      _
    // Predicated region
    $region42: #{tpu_custom_call.1} parent=1 // pred_check
      _
    $region43: #{tpu_custom_call.1} parent=1 // pred_check_branch
      %2546 = sbr.rel (0) target = $region45
    $region44: #{tpu_custom_call.1} parent=1 // pred_region
      _
    $region45: #{tpu_custom_call.1} parent=1 // pred_fallthru
      _
    %2547 = vsyncpa [#allocation4], 1
    %2548 = vsyncpa [#allocation6], 1
    %2549 = vsyncpa [#allocation9], 1

</llo_original>
